<compile_context>
chip_gen: v5e
topology: v5e:2x2
jax: 0.10.0
libtpu: 0.0.40
codegen_flags: <defaults>
</compile_context>

<pallas_src>
import functools

import jax
import jax.numpy as jnp
from jax.experimental import pallas as pl
from jax.experimental.pallas import tpu as pltpu


OUT_LANES = 128  # lane-dense packed-output width (>= f_in + emb)


# ----------------------------- slab layout (every section starts on an 8-row boundary)

def _slab_layout(heads, hidden, emb, f_in):
    up8 = lambda v: -(-v // 8) * 8
    lay = {}
    lay["w1"] = 0                                  # [f_in, heads*hidden]
    lay["a1"] = up8(lay["w1"] + f_in)              # block-diag [heads*hidden, 2*heads]
    lay["b1"] = up8(lay["a1"] + heads * hidden)    # [1, heads*hidden]
    lay["w2"] = up8(lay["b1"] + 1)                 # [heads*hidden, emb]
    lay["a2"] = up8(lay["w2"] + heads * hidden)    # [emb, 2]  cols: [a_dst | a_src]
    lay["b2"] = up8(lay["a2"] + emb)               # [1, emb]
    lay["wo"] = up8(lay["b2"] + 1)                 # [emb, OUT_LANES]  (Wd | I_emb | 0)
    lay["bo"] = up8(lay["wo"] + emb)               # [1, OUT_LANES]    (bd | 0)
    lay["total"] = up8(lay["bo"] + 1)
    return lay


# ----------------------------- math helpers

def _elu(x):
    # exact ELU; clamp the dead branch so exp() never overflows in discarded lanes
    return jnp.where(x > 0, x, jnp.exp(jnp.minimum(x, 0.0)) - 1.0)


def _masked_softmax_agg(e, neg_bias, values_bf16):
    """LeakyReLU + additive-bias mask + row softmax + aggregation matmul.

    e:           [R, R] f32 raw pairwise scores (dst rows, src cols)
    neg_bias:    [R, R] f32 additive mask (0 on edges, -1e30 otherwise)
    values_bf16: [R, D] bf16 values to aggregate
    """
    e = jnp.where(e > 0, e, 0.2 * e) + neg_bias                       # LeakyReLU(0.2)
    e = e - jnp.max(e, axis=-1, keepdims=True)
    p = jnp.exp(e)                                                    # masked -> 0
    inv = pl.reciprocal(jnp.maximum(jnp.sum(p, axis=-1, keepdims=True), 1e-20),
                        approx=True)                                  # EUP divide
    agg = jnp.dot(p.astype(jnp.bfloat16), values_bf16,
                  preferred_element_type=jnp.float32)
    return agg * inv


# ----------------------------- the Pallas kernel (whole batch per grid step)

def gat_autoencoder_kernel(heads, hidden, emb, f_in,
                           x_ref, bias_ref, slab_ref, out_ref):
    lay = _slab_layout(heads, hidden, emb, f_in)
    hh_tot = heads * hidden

    neg = bias_ref[0]                          # [R, R] f32 additive block-diag mask
    x = x_ref[...]                             # [R, f_in] bf16
    n = x.shape[0]

    # ---- GAT layer 1: all heads' node transforms + both score halves in 2 matmuls
    w1 = slab_ref[lay["w1"]:lay["w1"] + f_in, :hh_tot]                 # bf16 [f_in, H*hid]
    a1 = slab_ref[lay["a1"]:lay["a1"] + hh_tot, :2 * heads]            # bf16 block-diag
    hh = jnp.dot(x, w1, preferred_element_type=jnp.float32)           # [R, H*hid] f32
    hh_b = hh.astype(jnp.bfloat16)
    alpha = jnp.dot(hh_b, a1, preferred_element_type=jnp.float32)     # [R, 2*heads] f32

    # per-head softmax/agg (heads is static -> unrolled), fused with layer-2 input
    # transform: concat_h(o_h) @ W2 == sum_h o_h @ W2[h-block]
    h2 = jnp.zeros((n, emb), jnp.float32)
    for h in range(heads):
        e = alpha[:, 2 * h:2 * h + 1] + jnp.transpose(alpha[:, 2 * h + 1:2 * h + 2])
        agg = _masked_softmax_agg(e, neg, hh_b[:, h * hidden:(h + 1) * hidden])
        b1_h = slab_ref[lay["b1"]:lay["b1"] + 1, h * hidden:(h + 1) * hidden]
        o = _elu(agg + b1_h.astype(jnp.float32))
        w2_h = slab_ref[lay["w2"] + h * hidden:lay["w2"] + (h + 1) * hidden, :emb]
        h2 = h2 + jnp.dot(o.astype(jnp.bfloat16), w2_h,
                          preferred_element_type=jnp.float32)

    # ---- GAT layer 2 (heads=1)
    h2_b = h2.astype(jnp.bfloat16)
    a2t = slab_ref[lay["a2"]:lay["a2"] + emb, :2]                      # [emb, 2]
    alpha2 = jnp.dot(h2_b, a2t, preferred_element_type=jnp.float32)   # [R, 2]
    e2 = alpha2[:, 0:1] + jnp.transpose(alpha2[:, 1:2])
    b2 = slab_ref[lay["b2"]:lay["b2"] + 1, :emb].astype(jnp.float32)
    z = _masked_softmax_agg(e2, neg, h2_b) + b2                        # [R, emb] f32

    # ---- fused decoder + z pass-through -> ONE lane-dense full-width store
    #      out[:, :f_in] = z @ Wd + bd ; out[:, f_in:f_in+emb] = z ; rest 0
    w_out = slab_ref[lay["wo"]:lay["wo"] + emb, :].astype(jnp.float32)   # [emb, 128]
    b_out = slab_ref[lay["bo"]:lay["bo"] + 1, :].astype(jnp.float32)     # [1, 128]
    out_ref[...] = jnp.dot(z, w_out, preferred_element_type=jnp.float32) + b_out


# ----------------------------- wrapper

def gat_autoencoder(x, adj, slab, *, heads, hidden, emb, num_splits=1):
    b, n, f_in = x.shape
    assert b % num_splits == 0
    r = (b // num_splits) * n                  # rows per grid step

    bias = build_block_bias(adj, num_splits)                       # [S, r, r] f32
    x2 = x.reshape(b * n, f_in).astype(jnp.bfloat16)               # fold batch into rows

    kernel = functools.partial(gat_autoencoder_kernel, heads, hidden, emb, f_in)
    out = pl.pallas_call(
        kernel,
        out_shape=jax.ShapeDtypeStruct((b * n, OUT_LANES), jnp.float32),
        grid=(num_splits,),
        in_specs=[
            pl.BlockSpec((r, f_in), lambda i: (i, 0)),             # node features
            pl.BlockSpec((1, r, r), lambda i: (i, 0, 0)),          # additive mask
            pl.BlockSpec(slab.shape, lambda i: (0, 0)),            # params: resident
        ],
        out_specs=pl.BlockSpec((r, OUT_LANES), lambda i: (i, 0)),
        compiler_params=pltpu.CompilerParams(
            dimension_semantics=("parallel",)),    # v7x: num_splits=2 -> 2 TCs
    )(x2, bias, slab)

    x_hat = out[:, :f_in].reshape(b, n, f_in)
    z = out[:, f_in:f_in + emb].reshape(b, n, emb)
    return x_hat, z


# ----------------------------- host-side packing (one bf16 slab, one f32 bias mask)

def pack_param_slab(params, *, heads, hidden, emb, f_in):
    w1, as1, ad1, b1, w2, as2, ad2, b2, wd, bd = params
    lay = _slab_layout(heads, hidden, emb, f_in)
    hh_tot = heads * hidden
    slab = jnp.zeros((lay["total"], OUT_LANES), jnp.float32)
    slab = slab.at[lay["w1"]:lay["w1"] + f_in, :hh_tot].set(w1)
    for h in range(heads):                     # block-diagonal attention matrix
        rs = lay["a1"] + h * hidden
        slab = slab.at[rs:rs + hidden, 2 * h].set(ad1[h])
        slab = slab.at[rs:rs + hidden, 2 * h + 1].set(as1[h])
    slab = slab.at[lay["b1"], :hh_tot].set(b1[0])
    slab = slab.at[lay["w2"]:lay["w2"] + hh_tot, :emb].set(w2)
    slab = slab.at[lay["a2"]:lay["a2"] + emb, 0].set(ad2[0])
    slab = slab.at[lay["a2"]:lay["a2"] + emb, 1].set(as2[0])
    slab = slab.at[lay["b2"], :emb].set(b2[0])
    slab = slab.at[lay["wo"]:lay["wo"] + emb, :f_in].set(wd)
    slab = slab.at[lay["wo"]:lay["wo"] + emb, f_in:f_in + emb].set(jnp.eye(emb))
    slab = slab.at[lay["bo"], :f_in].set(bd[0])
    return slab.astype(jnp.bfloat16)


def build_block_bias(adj, num_splits):
    """[B,N,N] 0/1 adjacency (adj[dst,src]) -> per-split block-diagonal additive
    mask with self-loops (GATConv add_self_loops=True): 0 on edges, -1e30 otherwise."""
    b, n, _ = adj.shape
    gps = b // num_splits
    r = gps * n
    adj_sl = jnp.maximum(adj, jnp.eye(n, dtype=adj.dtype))     # guarantees non-empty rows
    mask = jnp.zeros((num_splits, r, r), dtype=bool)
    for s in range(num_splits):
        for g in range(gps):
            lo = g * n
            mask = mask.at[s, lo:lo + n, lo:lo + n].set(adj_sl[s * gps + g] > 0)
    return jnp.where(mask, 0.0, -1e30).astype(jnp.float32)


# ----------------------------- pure-JAX f32 reference (unpacked params)

def _attend_ref(hh, a_dst, a_src, mask):
    e = hh @ a_dst.T + (hh @ a_src.T).T
    e = jnp.where(e > 0, e, 0.2 * e)
    e = jnp.where(mask, e, -1e30)
    e = e - jnp.max(e, axis=-1, keepdims=True)
    p = jnp.exp(e)
    return (p / jnp.sum(p, axis=-1, keepdims=True)) @ hh


def ref_forward(x_b, adj_b, params, *, heads, hidden, emb):
    w1, as1, ad1, b1, w2, as2, ad2, b2, wd, bd = params
    n = x_b.shape[1]
    eye = jnp.eye(n, dtype=adj_b.dtype)

    def one(x, adj):
        mask = jnp.maximum(adj, eye) > 0
        outs = []
        for h in range(heads):
            hh = x @ w1[:, h * hidden:(h + 1) * hidden]
            o = _attend_ref(hh, ad1[h:h + 1], as1[h:h + 1], mask)
            outs.append(_elu(o + b1[:, h * hidden:(h + 1) * hidden]))
        h2 = jnp.concatenate(outs, axis=-1) @ w2
        z = _attend_ref(h2, ad2, as2, mask) + b2
        return z @ wd + bd, z

    return jax.vmap(one)(x_b, adj_b)


# ----------------------------- glue: params + deterministic batched graphs

def init_params(key, in_channels, hidden, emb, heads):
    ks = jax.random.split(key, 10)
    s = 0.2
    w1 = s * jax.random.normal(ks[0], (in_channels, heads * hidden), jnp.float32)
    as1 = s * jax.random.normal(ks[1], (heads, hidden), jnp.float32)
    ad1 = s * jax.random.normal(ks[2], (heads, hidden), jnp.float32)
    b1 = s * jax.random.normal(ks[3], (1, heads * hidden), jnp.float32)
    w2 = s * jax.random.normal(ks[4], (heads * hidden, emb), jnp.float32)
    as2 = s * jax.random.normal(ks[5], (1, emb), jnp.float32)
    ad2 = s * jax.random.normal(ks[6], (1, emb), jnp.float32)
    b2 = s * jax.random.normal(ks[7], (1, emb), jnp.float32)
    wd = s * jax.random.normal(ks[8], (emb, in_channels), jnp.float32)
    bd = s * jax.random.normal(ks[9], (1, in_channels), jnp.float32)
    return (w1, as1, ad1, b1, w2, as2, ad2, b2, wd, bd)


def build_batched_adj(batch, num_nodes):
    # Deterministic per-graph connectivity: bidirectional ring + one chord per node.
    # adj[dst, src] = 1. Self-loops are added by build_block_bias (add_self_loops=True).
    mats = []
    src = jnp.arange(num_nodes)
    for b in range(batch):
        a = jnp.zeros((num_nodes, num_nodes), jnp.float32)
        nxt = (src + 1) % num_nodes
        chord = (src + 2 + b) % num_nodes
        a = a.at[nxt, src].set(1.0)
        a = a.at[src, nxt].set(1.0)
        a = a.at[chord, src].set(1.0)
        mats.append(a)
    return jnp.stack(mats)


if __name__ == "__main__":
    B = 8               # graphs per call (batch folded into the row axis)
    N = 12              # nodes per graph  (B*N = 96 rows)
    IN_CHANNELS = 5     # len(numeric_cols)
    HIDDEN = 8
    EMB = 4
    HEADS = 2
    NUM_SPLITS = 1      # set to 2 on v7x to shard the batch across both TensorCores

    key = jax.random.PRNGKey(0)
    kx, kp = jax.random.split(key)
    x = jax.random.normal(kx, (B, N, IN_CHANNELS), jnp.float32)
    adj = build_batched_adj(B, N)

    params = init_params(kp, IN_CHANNELS, HIDDEN, EMB, HEADS)
    slab = pack_param_slab(params, heads=HEADS, hidden=HIDDEN, emb=EMB,
                           f_in=IN_CHANNELS)

    x_hat, z = gat_autoencoder(x, adj, slab, heads=HEADS, hidden=HIDDEN, emb=EMB,
                               num_splits=NUM_SPLITS)
    jax.block_until_ready((x_hat, z))

    x_hat_ref, z_ref = ref_forward(x, adj, params, heads=HEADS, hidden=HIDDEN, emb=EMB)
    assert x_hat.shape == (B, N, IN_CHANNELS) and z.shape == (B, N, EMB)
    # tolerance absorbs bf16 MXU operands + approx (EUP) softmax reciprocal
    err_x = float(jnp.max(jnp.abs(x_hat - x_hat_ref)))
    err_z = float(jnp.max(jnp.abs(z - z_ref)))
    assert jnp.allclose(x_hat, x_hat_ref, atol=5e-2, rtol=5e-2), err_x
    assert jnp.allclose(z, z_ref, atol=5e-2, rtol=5e-2), err_z
    print("KERNEL_OK")
</pallas_src>

<mosaic_0001>
module attributes {stable_mosaic.version = 11 : i64} {
  func.func @gat_autoencoder_kernel(%arg0: i32, %arg1: memref<96x5xbf16, #tpu.memory_space<vmem>>, %arg2: memref<1x96x96xf32, #tpu.memory_space<vmem>>, %arg3: memref<80x128xbf16, #tpu.memory_space<vmem>>, %arg4: memref<96x128xf32, #tpu.memory_space<vmem>>) attributes {dimension_semantics = [#tpu.dimension_semantics<parallel>], iteration_bounds = array<i64: 1>, scalar_prefetch = 0 : i64, scratch_operands = 0 : i64, tpu.core_type = #tpu.core_type<tc>, window_params = [{transform_indices = @transform_0, window_bounds = array<i64: 96, 5>}, {transform_indices = @transform_1, window_bounds = array<i64: 1, 96, 96>}, {pipeline_mode = #tpu.pipeline_mode<synchronous>, transform_indices = @transform_2, window_bounds = array<i64: 80, 128>}, {transform_indices = @transform_3, window_bounds = array<i64: 96, 128>}]} {
    %c0 = arith.constant 0 : index
    %c0_0 = arith.constant 0 : index
    %c0_1 = arith.constant 0 : index
    %0 = vector.load %arg2[%c0, %c0_0, %c0_1] : memref<1x96x96xf32, #tpu.memory_space<vmem>>, vector<1x96x96xf32>
    %1 = vector.shape_cast %0 : vector<1x96x96xf32> to vector<96x96xf32>
    %c0_2 = arith.constant 0 : index
    %c0_3 = arith.constant 0 : index
    %2 = vector.load %arg1[%c0_2, %c0_3] : memref<96x5xbf16, #tpu.memory_space<vmem>>, vector<96x5xbf16>
    %c0_4 = arith.constant 0 : index
    %c0_5 = arith.constant 0 : index
    %3 = vector.load %arg3[%c0_4, %c0_5] : memref<80x128xbf16, #tpu.memory_space<vmem>>, vector<5x16xbf16>
    %c8 = arith.constant 8 : index
    %c0_6 = arith.constant 0 : index
    %4 = vector.load %arg3[%c8, %c0_6] : memref<80x128xbf16, #tpu.memory_space<vmem>>, vector<16x4xbf16>
    %cst = arith.constant dense<0.000000e+00> : vector<96x16xf32>
    %5 = tpu.matmul %2, %3, %cst {dimension_numbers = #tpu.dot_dimension_numbers<[1], [0], [0], [1], [0, 0, 1, 1], [], []>} : vector<96x5xbf16>, vector<5x16xbf16>, vector<96x16xf32> -> vector<96x16xf32>
    %6 = arith.truncf %5 : vector<96x16xf32> to vector<96x16xbf16>
    %cst_7 = arith.constant dense<0.000000e+00> : vector<96x4xf32>
    %7 = tpu.matmul %6, %4, %cst_7 {dimension_numbers = #tpu.dot_dimension_numbers<[1], [0], [0], [1], [0, 0, 1, 1], [], []>} : vector<96x16xbf16>, vector<16x4xbf16>, vector<96x4xf32> -> vector<96x4xf32>
    %cst_8 = arith.constant 0.000000e+00 : f32
    %8 = vector.broadcast %cst_8 : f32 to vector<96x4xf32>
    %9 = vector.extract_strided_slice %7 {offsets = [0, 0], sizes = [96, 1], strides = [1, 1]} : vector<96x4xf32> to vector<96x1xf32>
    %10 = vector.extract_strided_slice %7 {offsets = [0, 1], sizes = [96, 1], strides = [1, 1]} : vector<96x4xf32> to vector<96x1xf32>
    %11 = tpu.transpose %10, [1, 0] : vector<96x1xf32> -> vector<1x96xf32>
    %12 = vector.broadcast %9 : vector<96x1xf32> to vector<96x96xf32>
    %13 = vector.broadcast %11 : vector<1x96xf32> to vector<96x96xf32>
    %14 = arith.addf %12, %13 : vector<96x96xf32>
    %15 = vector.extract_strided_slice %6 {offsets = [0, 0], sizes = [96, 8], strides = [1, 1]} : vector<96x16xbf16> to vector<96x8xbf16>
    %cst_9 = arith.constant 0.000000e+00 : f32
    %16 = vector.broadcast %cst_9 : f32 to vector<96x96xf32>
    %17 = arith.cmpf ogt, %14, %16 : vector<96x96xf32>
    %cst_10 = arith.constant 2.000000e-01 : f32
    %18 = vector.broadcast %cst_10 : f32 to vector<96x96xf32>
    %19 = arith.mulf %18, %14 : vector<96x96xf32>
    %20 = arith.select %17, %14, %19 : vector<96x96xi1>, vector<96x96xf32>
    %21 = arith.addf %20, %1 : vector<96x96xf32>
    %cst_11 = arith.constant dense<0xFF800000> : vector<96xf32>
    %22 = vector.multi_reduction <maximumf>, %21, %cst_11 [1] : vector<96x96xf32> to vector<96xf32>
    %23 = vector.shape_cast %22 : vector<96xf32> to vector<96x1xf32>
    %24 = vector.broadcast %23 : vector<96x1xf32> to vector<96x96xf32>
    %25 = arith.subf %21, %24 : vector<96x96xf32>
    %26 = math.exp %25 : vector<96x96xf32>
    %cst_12 = arith.constant dense<0.000000e+00> : vector<96xf32>
    %27 = vector.multi_reduction <add>, %26, %cst_12 [1] : vector<96x96xf32> to vector<96xf32>
    %28 = vector.shape_cast %27 : vector<96xf32> to vector<96x1xf32>
    %cst_13 = arith.constant 9.99999968E-21 : f32
    %29 = vector.broadcast %cst_13 : f32 to vector<96x1xf32>
    %30 = arith.maximumf %28, %29 : vector<96x1xf32>
    %31 = tpu.reciprocal %30 {approx = true} : vector<96x1xf32> -> vector<96x1xf32>
    %32 = arith.truncf %26 : vector<96x96xf32> to vector<96x96xbf16>
    %cst_14 = arith.constant dense<0.000000e+00> : vector<96x8xf32>
    %33 = tpu.matmul %32, %15, %cst_14 {dimension_numbers = #tpu.dot_dimension_numbers<[1], [0], [0], [1], [0, 0, 1, 1], [], []>} : vector<96x96xbf16>, vector<96x8xbf16>, vector<96x8xf32> -> vector<96x8xf32>
    %34 = vector.broadcast %31 : vector<96x1xf32> to vector<96x8xf32>
    %35 = arith.mulf %33, %34 : vector<96x8xf32>
    %c24 = arith.constant 24 : index
    %c0_15 = arith.constant 0 : index
    %36 = vector.load %arg3[%c24, %c0_15] : memref<80x128xbf16, #tpu.memory_space<vmem>>, vector<1x8xbf16>
    %37 = arith.extf %36 : vector<1x8xbf16> to vector<1x8xf32>
    %38 = vector.broadcast %37 : vector<1x8xf32> to vector<96x8xf32>
    %39 = arith.addf %35, %38 : vector<96x8xf32>
    %cst_16 = arith.constant 0.000000e+00 : f32
    %40 = vector.broadcast %cst_16 : f32 to vector<96x8xf32>
    %41 = arith.cmpf ogt, %39, %40 : vector<96x8xf32>
    %cst_17 = arith.constant 0.000000e+00 : f32
    %42 = vector.broadcast %cst_17 : f32 to vector<96x8xf32>
    %43 = arith.minimumf %39, %42 : vector<96x8xf32>
    %44 = math.exp %43 : vector<96x8xf32>
    %cst_18 = arith.constant 1.000000e+00 : f32
    %45 = vector.broadcast %cst_18 : f32 to vector<96x8xf32>
    %46 = arith.subf %44, %45 : vector<96x8xf32>
    %47 = arith.select %41, %39, %46 : vector<96x8xi1>, vector<96x8xf32>
    %c32 = arith.constant 32 : index
    %c0_19 = arith.constant 0 : index
    %48 = vector.load %arg3[%c32, %c0_19] : memref<80x128xbf16, #tpu.memory_space<vmem>>, vector<8x4xbf16>
    %49 = arith.truncf %47 : vector<96x8xf32> to vector<96x8xbf16>
    %cst_20 = arith.constant dense<0.000000e+00> : vector<96x4xf32>
    %50 = tpu.matmul %49, %48, %cst_20 {dimension_numbers = #tpu.dot_dimension_numbers<[1], [0], [0], [1], [0, 0, 1, 1], [], []>} : vector<96x8xbf16>, vector<8x4xbf16>, vector<96x4xf32> -> vector<96x4xf32>
    %51 = arith.addf %8, %50 : vector<96x4xf32>
    %52 = vector.extract_strided_slice %7 {offsets = [0, 2], sizes = [96, 1], strides = [1, 1]} : vector<96x4xf32> to vector<96x1xf32>
    %53 = vector.extract_strided_slice %7 {offsets = [0, 3], sizes = [96, 1], strides = [1, 1]} : vector<96x4xf32> to vector<96x1xf32>
    %54 = tpu.transpose %53, [1, 0] : vector<96x1xf32> -> vector<1x96xf32>
    %55 = vector.broadcast %52 : vector<96x1xf32> to vector<96x96xf32>
    %56 = vector.broadcast %54 : vector<1x96xf32> to vector<96x96xf32>
    %57 = arith.addf %55, %56 : vector<96x96xf32>
    %58 = vector.extract_strided_slice %6 {offsets = [0, 8], sizes = [96, 8], strides = [1, 1]} : vector<96x16xbf16> to vector<96x8xbf16>
    %cst_21 = arith.constant 0.000000e+00 : f32
    %59 = vector.broadcast %cst_21 : f32 to vector<96x96xf32>
    %60 = arith.cmpf ogt, %57, %59 : vector<96x96xf32>
    %cst_22 = arith.constant 2.000000e-01 : f32
    %61 = vector.broadcast %cst_22 : f32 to vector<96x96xf32>
    %62 = arith.mulf %61, %57 : vector<96x96xf32>
    %63 = arith.select %60, %57, %62 : vector<96x96xi1>, vector<96x96xf32>
    %64 = arith.addf %63, %1 : vector<96x96xf32>
    %cst_23 = arith.constant dense<0xFF800000> : vector<96xf32>
    %65 = vector.multi_reduction <maximumf>, %64, %cst_23 [1] : vector<96x96xf32> to vector<96xf32>
    %66 = vector.shape_cast %65 : vector<96xf32> to vector<96x1xf32>
    %67 = vector.broadcast %66 : vector<96x1xf32> to vector<96x96xf32>
    %68 = arith.subf %64, %67 : vector<96x96xf32>
    %69 = math.exp %68 : vector<96x96xf32>
    %cst_24 = arith.constant dense<0.000000e+00> : vector<96xf32>
    %70 = vector.multi_reduction <add>, %69, %cst_24 [1] : vector<96x96xf32> to vector<96xf32>
    %71 = vector.shape_cast %70 : vector<96xf32> to vector<96x1xf32>
    %cst_25 = arith.constant 9.99999968E-21 : f32
    %72 = vector.broadcast %cst_25 : f32 to vector<96x1xf32>
    %73 = arith.maximumf %71, %72 : vector<96x1xf32>
    %74 = tpu.reciprocal %73 {approx = true} : vector<96x1xf32> -> vector<96x1xf32>
    %75 = arith.truncf %69 : vector<96x96xf32> to vector<96x96xbf16>
    %cst_26 = arith.constant dense<0.000000e+00> : vector<96x8xf32>
    %76 = tpu.matmul %75, %58, %cst_26 {dimension_numbers = #tpu.dot_dimension_numbers<[1], [0], [0], [1], [0, 0, 1, 1], [], []>} : vector<96x96xbf16>, vector<96x8xbf16>, vector<96x8xf32> -> vector<96x8xf32>
    %77 = vector.broadcast %74 : vector<96x1xf32> to vector<96x8xf32>
    %78 = arith.mulf %76, %77 : vector<96x8xf32>
    %c24_27 = arith.constant 24 : index
    %c8_28 = arith.constant 8 : index
    %79 = vector.load %arg3[%c24_27, %c8_28] : memref<80x128xbf16, #tpu.memory_space<vmem>>, vector<1x8xbf16>
    %80 = arith.extf %79 : vector<1x8xbf16> to vector<1x8xf32>
    %81 = vector.broadcast %80 : vector<1x8xf32> to vector<96x8xf32>
    %82 = arith.addf %78, %81 : vector<96x8xf32>
    %cst_29 = arith.constant 0.000000e+00 : f32
    %83 = vector.broadcast %cst_29 : f32 to vector<96x8xf32>
    %84 = arith.cmpf ogt, %82, %83 : vector<96x8xf32>
    %cst_30 = arith.constant 0.000000e+00 : f32
    %85 = vector.broadcast %cst_30 : f32 to vector<96x8xf32>
    %86 = arith.minimumf %82, %85 : vector<96x8xf32>
    %87 = math.exp %86 : vector<96x8xf32>
    %cst_31 = arith.constant 1.000000e+00 : f32
    %88 = vector.broadcast %cst_31 : f32 to vector<96x8xf32>
    %89 = arith.subf %87, %88 : vector<96x8xf32>
    %90 = arith.select %84, %82, %89 : vector<96x8xi1>, vector<96x8xf32>
    %c40 = arith.constant 40 : index
    %c0_32 = arith.constant 0 : index
    %91 = vector.load %arg3[%c40, %c0_32] : memref<80x128xbf16, #tpu.memory_space<vmem>>, vector<8x4xbf16>
    %92 = arith.truncf %90 : vector<96x8xf32> to vector<96x8xbf16>
    %cst_33 = arith.constant dense<0.000000e+00> : vector<96x4xf32>
    %93 = tpu.matmul %92, %91, %cst_33 {dimension_numbers = #tpu.dot_dimension_numbers<[1], [0], [0], [1], [0, 0, 1, 1], [], []>} : vector<96x8xbf16>, vector<8x4xbf16>, vector<96x4xf32> -> vector<96x4xf32>
    %94 = arith.addf %51, %93 : vector<96x4xf32>
    %95 = arith.truncf %94 : vector<96x4xf32> to vector<96x4xbf16>
    %c48 = arith.constant 48 : index
    %c0_34 = arith.constant 0 : index
    %96 = vector.load %arg3[%c48, %c0_34] : memref<80x128xbf16, #tpu.memory_space<vmem>>, vector<4x2xbf16>
    %cst_35 = arith.constant dense<0.000000e+00> : vector<96x2xf32>
    %97 = tpu.matmul %95, %96, %cst_35 {dimension_numbers = #tpu.dot_dimension_numbers<[1], [0], [0], [1], [0, 0, 1, 1], [], []>} : vector<96x4xbf16>, vector<4x2xbf16>, vector<96x2xf32> -> vector<96x2xf32>
    %98 = vector.extract_strided_slice %97 {offsets = [0, 0], sizes = [96, 1], strides = [1, 1]} : vector<96x2xf32> to vector<96x1xf32>
    %99 = vector.extract_strided_slice %97 {offsets = [0, 1], sizes = [96, 1], strides = [1, 1]} : vector<96x2xf32> to vector<96x1xf32>
    %100 = tpu.transpose %99, [1, 0] : vector<96x1xf32> -> vector<1x96xf32>
    %101 = vector.broadcast %98 : vector<96x1xf32> to vector<96x96xf32>
    %102 = vector.broadcast %100 : vector<1x96xf32> to vector<96x96xf32>
    %103 = arith.addf %101, %102 : vector<96x96xf32>
    %c56 = arith.constant 56 : index
    %c0_36 = arith.constant 0 : index
    %104 = vector.load %arg3[%c56, %c0_36] : memref<80x128xbf16, #tpu.memory_space<vmem>>, vector<1x4xbf16>
    %105 = arith.extf %104 : vector<1x4xbf16> to vector<1x4xf32>
    %cst_37 = arith.constant 0.000000e+00 : f32
    %106 = vector.broadcast %cst_37 : f32 to vector<96x96xf32>
    %107 = arith.cmpf ogt, %103, %106 : vector<96x96xf32>
    %cst_38 = arith.constant 2.000000e-01 : f32
    %108 = vector.broadcast %cst_38 : f32 to vector<96x96xf32>
    %109 = arith.mulf %108, %103 : vector<96x96xf32>
    %110 = arith.select %107, %103, %109 : vector<96x96xi1>, vector<96x96xf32>
    %111 = arith.addf %110, %1 : vector<96x96xf32>
    %cst_39 = arith.constant dense<0xFF800000> : vector<96xf32>
    %112 = vector.multi_reduction <maximumf>, %111, %cst_39 [1] : vector<96x96xf32> to vector<96xf32>
    %113 = vector.shape_cast %112 : vector<96xf32> to vector<96x1xf32>
    %114 = vector.broadcast %113 : vector<96x1xf32> to vector<96x96xf32>
    %115 = arith.subf %111, %114 : vector<96x96xf32>
    %116 = math.exp %115 : vector<96x96xf32>
    %cst_40 = arith.constant dense<0.000000e+00> : vector<96xf32>
    %117 = vector.multi_reduction <add>, %116, %cst_40 [1] : vector<96x96xf32> to vector<96xf32>
    %118 = vector.shape_cast %117 : vector<96xf32> to vector<96x1xf32>
    %cst_41 = arith.constant 9.99999968E-21 : f32
    %119 = vector.broadcast %cst_41 : f32 to vector<96x1xf32>
    %120 = arith.maximumf %118, %119 : vector<96x1xf32>
    %121 = tpu.reciprocal %120 {approx = true} : vector<96x1xf32> -> vector<96x1xf32>
    %122 = arith.truncf %116 : vector<96x96xf32> to vector<96x96xbf16>
    %cst_42 = arith.constant dense<0.000000e+00> : vector<96x4xf32>
    %123 = tpu.matmul %122, %95, %cst_42 {dimension_numbers = #tpu.dot_dimension_numbers<[1], [0], [0], [1], [0, 0, 1, 1], [], []>} : vector<96x96xbf16>, vector<96x4xbf16>, vector<96x4xf32> -> vector<96x4xf32>
    %124 = vector.broadcast %121 : vector<96x1xf32> to vector<96x4xf32>
    %125 = arith.mulf %123, %124 : vector<96x4xf32>
    %126 = vector.broadcast %105 : vector<1x4xf32> to vector<96x4xf32>
    %127 = arith.addf %125, %126 : vector<96x4xf32>
    %c64 = arith.constant 64 : index
    %c0_43 = arith.constant 0 : index
    %128 = vector.load %arg3[%c64, %c0_43] : memref<80x128xbf16, #tpu.memory_space<vmem>>, vector<4x128xbf16>
    %129 = arith.extf %128 : vector<4x128xbf16> to vector<4x128xf32>
    %c72 = arith.constant 72 : index
    %c0_44 = arith.constant 0 : index
    %130 = vector.load %arg3[%c72, %c0_44] : memref<80x128xbf16, #tpu.memory_space<vmem>>, vector<1x128xbf16>
    %131 = arith.extf %130 : vector<1x128xbf16> to vector<1x128xf32>
    %cst_45 = arith.constant dense<0.000000e+00> : vector<96x128xf32>
    %132 = tpu.matmul %127, %129, %cst_45 {dimension_numbers = #tpu.dot_dimension_numbers<[1], [0], [0], [1], [0, 0, 1, 1], [], []>} : vector<96x4xf32>, vector<4x128xf32>, vector<96x128xf32> -> vector<96x128xf32>
    %133 = vector.broadcast %131 : vector<1x128xf32> to vector<96x128xf32>
    %134 = arith.addf %132, %133 : vector<96x128xf32>
    %c0_46 = arith.constant 0 : index
    %c0_47 = arith.constant 0 : index
    %135 = vector.load %arg4[%c0_46, %c0_47] : memref<96x128xf32, #tpu.memory_space<vmem>>, vector<96x128xf32>
    tpu.vector_store %arg4[%c0_46, %c0_47], %134 {strides = array<i32>} : memref<96x128xf32, #tpu.memory_space<vmem>>, vector<96x128xf32>,
    return
  }
  func.func @transform_0(%arg0: i32) -> (i32, i32) {
    %c0_i32 = arith.constant 0 : i32
    %c0_i32_0 = arith.constant 0 : i32
    return %arg0, %c0_i32 : i32, i32
  }
  func.func @transform_1(%arg0: i32) -> (i32, i32, i32) {
    %c0_i32 = arith.constant 0 : i32
    %c0_i32_0 = arith.constant 0 : i32
    %c0_i32_1 = arith.constant 0 : i32
    return %arg0, %c0_i32, %c0_i32_0 : i32, i32, i32
  }
  func.func @transform_2(%arg0: i32) -> (i32, i32) {
    %c0_i32 = arith.constant 0 : i32
    %c0_i32_0 = arith.constant 0 : i32
    %c0_i32_1 = arith.constant 0 : i32
    return %c0_i32, %c0_i32_0 : i32, i32
  }
  func.func @transform_3(%arg0: i32) -> (i32, i32) {
    %c0_i32 = arith.constant 0 : i32
    %c0_i32_0 = arith.constant 0 : i32
    return %arg0, %c0_i32 : i32, i32
  }
}

</mosaic_0001>

<llo_original>
// kernel: tpu_custom_call.1
$region0: #{tpu_custom_call.1}
  #allocation0 [shape = 'u32[]', space=smem, size = 0x4, offset = 0x4, fixed_abs, tag = 'smem constant byte address 0x4 - core index']
  #allocation1 [shape = 'u32[72,128]{1,0:T(1,128)}', space=vmem, size = 0x9000, scoped, tag = 'internal scratch']
  %s0 = inlined_call_operand.vmem [shape: bf16[96,5], index: 0, kind: input, shape index: {}]
  %s1 = inlined_call_operand.hbm [shape: f32[1,96,96], index: 1, kind: input, shape index: {}]
  %s2 = inlined_call_operand.vmem [shape: bf16[80,128], index: 2, kind: input, shape index: {}]
  %s3 = inlined_call_operand.hbm [shape: f32[96,128], index: 3, kind: output, shape index: {}]
  %s4 = sld [smem:[#allocation0]]
  $region26: #{tpu_custom_call.1} parent=0
    _
  %s6 = ssub.s32 1, %s4
  %s7 = scalar_select 0, %s6, %s4
  $region1: #{tpu_custom_call.1} parent=0
    #allocation2 [shape = 'u8[49152]{0}', space=vmem, size = 0xc000, scoped, tag = 'input window, operand 1, single buffered']
    #allocation3 [shape = 's32[1]{0}', space=sflag, size = 0x4, scoped, tag = 'scoped memory for tpu_custom_call.1']
    #allocation4 [shape = 's32[1]{0}', space=sflag, size = 0x4, scoped, tag = 'scoped memory for tpu_custom_call.1']
    #allocation5 [shape = 'u8[49152]{0}', space=vmem, size = 0xc000, scoped, tag = 'output window, operand 0, single buffered']
    %8 = vsyncpa [#allocation3], 0
    %9 = vsyncpa [#allocation4], 0
    // Predicated region
    $region2: #{tpu_custom_call.1} parent=1 // pred_check
      _
    $region3: #{tpu_custom_call.1} parent=1 // pred_check_branch
      %11 = sbr.rel (0) target = $region5
    $region4: #{tpu_custom_call.1} parent=1 // pred_region
      _
    $region5: #{tpu_custom_call.1} parent=1 // pred_fallthru
      _
    // Predicated region
    $region6: #{tpu_custom_call.1} parent=1 // pred_check
      _
    $region7: #{tpu_custom_call.1} parent=1 // pred_check_branch
      %13 = sbr.rel (0) target = $region9
    $region8: #{tpu_custom_call.1} parent=1 // pred_region
      %15 = vsyncadd [#allocation3], 0
      %s16 = sshll.u32 %s1, 4
      %s17 = int_to_ptr.hbm [resolvable:$true] %s16
      %s18 = sshll.u32 [#allocation2], 4
      %s19 = int_to_ptr.vmem [resolvable:$true] %s18
      %24 = dma.hbm_to_vmem [thread:$0]  %s17, 1536, %s19, [#allocation3], 128, 128, 8
    $region9: #{tpu_custom_call.1} parent=1 // pred_fallthru
      _
    // Predicated region
    $region10: #{tpu_custom_call.1} parent=1 // pred_check
      _
    $region11: #{tpu_custom_call.1} parent=1 // pred_check_branch
      %26 = sbr.rel (0) target = $region13
    $region12: #{tpu_custom_call.1} parent=1 // pred_region
      _
    $region13: #{tpu_custom_call.1} parent=1 // pred_fallthru
      _
    // Predicated region
    $region14: #{tpu_custom_call.1} parent=1 // pred_check
      _
    $region15: #{tpu_custom_call.1} parent=1 // pred_check_branch
      %28 = sbr.rel (0) target = $region17
    $region16: #{tpu_custom_call.1} parent=1 // pred_region
      %30 = dma.done [#allocation3], 1536
    $region17: #{tpu_custom_call.1} parent=1 // pred_fallthru
      _
    %v32 = vld [vmem:[#allocation2] sm:$0xff]
    %v33 = vld [vmem:[#allocation2 + $0x8] sm:$0xff]
    %v34 = vld [vmem:[#allocation2 + $0x10] sm:$0xff]
    %v35 = vld [vmem:[#allocation2 + $0x18] sm:$0xff]
    %v36 = vld [vmem:[#allocation2 + $0x20] sm:$0xff]
    %v37 = vld [vmem:[#allocation2 + $0x28] sm:$0xff]
    %v38 = vld [vmem:[#allocation2 + $0x30] sm:$0xff]
    %v39 = vld [vmem:[#allocation2 + $0x38] sm:$0xff]
    %v40 = vld [vmem:[#allocation2 + $0x40] sm:$0xff]
    %v41 = vld [vmem:[#allocation2 + $0x48] sm:$0xff]
    %v42 = vld [vmem:[#allocation2 + $0x50] sm:$0xff]
    %v43 = vld [vmem:[#allocation2 + $0x58] sm:$0xff]
    %v44 = vld [vmem:[%s0] sm:$0xf]
    %v45 = vld [vmem:[%s0 + $0x4] sm:$0xf]
    %v46 = vld [vmem:[%s0 + $0x8] sm:$0xf]
    %v47 = vld [vmem:[%s0 + $0xc] sm:$0xf]
    %v48 = vld [vmem:[%s0 + $0x10] sm:$0xf]
    %v49 = vld [vmem:[%s0 + $0x14] sm:$0xf]
    %v50 = vld [vmem:[%s0 + $0x18] sm:$0xf]
    %v51 = vld [vmem:[%s0 + $0x1c] sm:$0xf]
    %v52 = vld [vmem:[%s0 + $0x20] sm:$0xf]
    %v53 = vld [vmem:[%s0 + $0x24] sm:$0xf]
    %v54 = vld [vmem:[%s0 + $0x28] sm:$0xf]
    %v55 = vld [vmem:[%s0 + $0x2c] sm:$0xf]
    %v56 = vld [vmem:[%s2] sm:$0x7]
    %v57 = vld [vmem:[%s2 + $0x4] sm:$0xf]
    %v58 = vld [vmem:[%s2 + $0x8] sm:$0xf]
    %v71 = vunpack.c.l.b16 %v44
    %v72 = vunpack.c.l.b16 %v45
    %v73 = vunpack.c.l.b16 %v46
    %v74 = vunpack.c.l.b16 %v47
    %v75 = vunpack.c.l.b16 %v48
    %v76 = vunpack.c.l.b16 %v49
    %v77 = vunpack.c.l.b16 %v50
    %v78 = vunpack.c.l.b16 %v51
    %v79 = vunpack.c.l.b16 %v52
    %v80 = vunpack.c.l.b16 %v53
    %v81 = vunpack.c.l.b16 %v54
    %v82 = vunpack.c.l.b16 %v55
    %v83 = vpack.c.b16 %v72, %v71
    %v84 = vpack.c.b16 %v74, %v73
    %v85 = vpack.c.b16 %v76, %v75
    %v86 = vpack.c.b16 %v78, %v77
    %v87 = vpack.c.b16 %v80, %v79
    %v88 = vpack.c.b16 %v82, %v81
    %vm89 = vcmask 39936
    %v91 = vsel %vm89, %v83, 0
    %v94 = vsel %vm89, %v84, 0
    %v97 = vsel %vm89, %v85, 0
    %v100 = vsel %vm89, %v86, 0
    %v103 = vsel %vm89, %v87, 0
    %v106 = vsel %vm89, %v88, 0
    %vm108 = vcmask 1041408
    %vm109 = vcmask 1042432
    %v110 = vsel %vm108, 4294967295, 65535
    %v111 = vsel %vm109, %v110, 0
    %v113 = vand.u32 %v56, %v111
    %115 = vmatpush.bf16.msra.mxu0 0
    %116 = vmatpush.bf16.msra.mxu0 0
    %117 = vmatpush.bf16.msra.mxu0 0
    %118 = vmatpush.bf16.msra.mxu0 0
    %119 = vmatpush.bf16.msra.mxu0 0
    %120 = vmatpush.bf16.msra.mxu0 0
    %121 = vmatpush.bf16.msra.mxu0 0
    %122 = vmatpush.bf16.msra.mxu0 %v113
    %123 = vmatmul.bf16.gmra.mxu0 %v91
    %v124 = vpop.f32.mrf.mxu0
    %v125 = vadd.f32 0.0, %v124
    %v126 = vpop.f32.mrf.mxu0
    %v127 = vadd.f32 0.0, %v126
    %128 = vmatmul.bf16.gmra.mxu0 %v94
    %v129 = vpop.f32.mrf.mxu0
    %v130 = vadd.f32 0.0, %v129
    %v131 = vpop.f32.mrf.mxu0
    %v132 = vadd.f32 0.0, %v131
    %133 = vmatmul.bf16.gmra.mxu0 %v97
    %v134 = vpop.f32.mrf.mxu0
    %v135 = vadd.f32 0.0, %v134
    %v136 = vpop.f32.mrf.mxu0
    %v137 = vadd.f32 0.0, %v136
    %138 = vmatmul.bf16.gmra.mxu0 %v100
    %v139 = vpop.f32.mrf.mxu0
    %v140 = vadd.f32 0.0, %v139
    %v141 = vpop.f32.mrf.mxu0
    %v142 = vadd.f32 0.0, %v141
    %143 = vmatmul.bf16.gmra.mxu0 %v103
    %v144 = vpop.f32.mrf.mxu0
    %v145 = vadd.f32 0.0, %v144
    %v146 = vpop.f32.mrf.mxu0
    %v147 = vadd.f32 0.0, %v146
    %148 = vmatmul.bf16.gmra.mxu0 %v106
    %v149 = vpop.f32.mrf.mxu0
    %v150 = vadd.f32 0.0, %v149
    %v151 = vpop.f32.mrf.mxu0
    %v152 = vadd.f32 0.0, %v151
    %153 = vdwg.mxu0
    %v154 = vpack.c.bf16 %v125, %v125
    %v155 = vpack.c.bf16 %v127, %v127
    %v156 = vpack.c.bf16 %v130, %v130
    %v157 = vpack.c.bf16 %v132, %v132
    %v158 = vpack.c.bf16 %v135, %v135
    %v159 = vpack.c.bf16 %v137, %v137
    %v160 = vpack.c.bf16 %v140, %v140
    %v161 = vpack.c.bf16 %v142, %v142
    %v162 = vpack.c.bf16 %v145, %v145
    %v163 = vpack.c.bf16 %v147, %v147
    %v164 = vpack.c.bf16 %v150, %v150
    %v165 = vpack.c.bf16 %v152, %v152
    %v178 = vunpack.c.l.b16 %v154
    %v179 = vunpack.c.l.b16 %v155
    %v180 = vunpack.c.l.b16 %v156
    %v181 = vunpack.c.l.b16 %v157
    %v182 = vunpack.c.l.b16 %v158
    %v183 = vunpack.c.l.b16 %v159
    %v184 = vunpack.c.l.b16 %v160
    %v185 = vunpack.c.l.b16 %v161
    %v186 = vunpack.c.l.b16 %v162
    %v187 = vunpack.c.l.b16 %v163
    %v188 = vunpack.c.l.b16 %v164
    %v189 = vunpack.c.l.b16 %v165
    %v190 = vpack.c.b16 %v179, %v178
    %v191 = vpack.c.b16 %v181, %v180
    %v192 = vpack.c.b16 %v183, %v182
    %v193 = vpack.c.b16 %v185, %v184
    %v194 = vpack.c.b16 %v187, %v186
    %v195 = vpack.c.b16 %v189, %v188
    %v198 = vunpack.c.l.b16 %v57
    %v199 = vunpack.c.l.b16 %v58
    %v200 = vpack.c.b16 %v199, %v198
    %vm202 = vcmask 130048
    %v204 = vsel %vm202, %v190, 0
    %v207 = vsel %vm202, %v191, 0
    %v210 = vsel %vm202, %v192, 0
    %v213 = vsel %vm202, %v193, 0
    %v216 = vsel %vm202, %v194, 0
    %v219 = vsel %vm202, %v195, 0
    %221 = vmatpush.bf16.msra.mxu0 0
    %222 = vmatpush.bf16.msra.mxu0 0
    %223 = vmatpush.bf16.msra.mxu0 0
    %224 = vmatpush.bf16.msra.mxu0 0
    %225 = vmatpush.bf16.msra.mxu0 0
    %226 = vmatpush.bf16.msra.mxu0 0
    %227 = vmatpush.bf16.msra.mxu0 0
    %228 = vmatpush.bf16.msra.mxu0 %v200
    %229 = vmatmul.bf16.gmra.mxu0 %v204
    %v230 = vpop.f32.mrf.mxu0
    %v231 = vadd.f32 0.0, %v230
    %v232 = vpop.f32.mrf.mxu0
    %v233 = vadd.f32 0.0, %v232
    %234 = vmatmul.bf16.gmra.mxu0 %v207
    %v235 = vpop.f32.mrf.mxu0
    %v236 = vadd.f32 0.0, %v235
    %v237 = vpop.f32.mrf.mxu0
    %v238 = vadd.f32 0.0, %v237
    %239 = vmatmul.bf16.gmra.mxu0 %v210
    %v240 = vpop.f32.mrf.mxu0
    %v241 = vadd.f32 0.0, %v240
    %v242 = vpop.f32.mrf.mxu0
    %v243 = vadd.f32 0.0, %v242
    %244 = vmatmul.bf16.gmra.mxu0 %v213
    %v245 = vpop.f32.mrf.mxu0
    %v246 = vadd.f32 0.0, %v245
    %v247 = vpop.f32.mrf.mxu0
    %v248 = vadd.f32 0.0, %v247
    %249 = vmatmul.bf16.gmra.mxu0 %v216
    %v250 = vpop.f32.mrf.mxu0
    %v251 = vadd.f32 0.0, %v250
    %v252 = vpop.f32.mrf.mxu0
    %v253 = vadd.f32 0.0, %v252
    %254 = vmatmul.bf16.gmra.mxu0 %v219
    %v255 = vpop.f32.mrf.mxu0
    %v256 = vadd.f32 0.0, %v255
    %v257 = vpop.f32.mrf.mxu0
    %v258 = vadd.f32 0.0, %v257
    %259 = vdwg.mxu0
    %272 = vrot.lane.b32.xlu0 %v231, 127
    %v273 = vpop.permute.xlu0 %272
    %274 = vrot.lane.b32.xlu0 %v233, 127
    %v275 = vpop.permute.xlu0 %274
    %276 = vrot.lane.b32.xlu0 %v236, 127
    %v277 = vpop.permute.xlu0 %276
    %278 = vrot.lane.b32.xlu0 %v238, 127
    %v279 = vpop.permute.xlu0 %278
    %280 = vrot.lane.b32.xlu0 %v241, 127
    %v281 = vpop.permute.xlu0 %280
    %282 = vrot.lane.b32.xlu0 %v243, 127
    %v283 = vpop.permute.xlu0 %282
    %284 = vrot.lane.b32.xlu0 %v246, 127
    %v285 = vpop.permute.xlu0 %284
    %286 = vrot.lane.b32.xlu0 %v248, 127
    %v287 = vpop.permute.xlu0 %286
    %288 = vrot.lane.b32.xlu0 %v251, 127
    %v289 = vpop.permute.xlu0 %288
    %290 = vrot.lane.b32.xlu0 %v253, 127
    %v291 = vpop.permute.xlu0 %290
    %292 = vrot.lane.b32.xlu0 %v256, 127
    %v293 = vpop.permute.xlu0 %292
    %294 = vrot.lane.b32.xlu0 %v258, 127
    %v295 = vpop.permute.xlu0 %294
    %308 = vxpose.xlu0.b32.start [1/16] %v273, 128
    %309 = vxpose.xlu0.b32.cont [2/16] %v275, 128
    %310 = vxpose.xlu0.b32.cont [3/16] %v277, 128
    %311 = vxpose.xlu0.b32.cont [4/16] %v279, 128
    %312 = vxpose.xlu0.b32.cont [5/16] %v281, 128
    %313 = vxpose.xlu0.b32.cont [6/16] %v283, 128
    %314 = vxpose.xlu0.b32.cont [7/16] %v285, 128
    %315 = vxpose.xlu0.b32.cont [8/16] %v287, 128
    %316 = vxpose.xlu0.b32.cont [9/16] %v289, 128
    %317 = vxpose.xlu0.b32.cont [10/16] %v291, 128
    %318 = vxpose.xlu0.b32.cont [11/16] %v293, 128
    %319 = vxpose.xlu0.b32.cont [12/16] %v295, 128
    %320 = vxpose.xlu0.b32.cont [13/16] 0.0, 128
    %321 = vxpose.xlu0.b32.cont [14/16] 0.0, 128
    %322 = vxpose.xlu0.b32.cont [15/16] 0.0, 128
    %323 = vxpose.xlu0.b32.end [16/16] 0.0, 128
    %v324 = vpop.trf.xlu0
    %v325 = vpop.trf.xlu0
    %v326 = vpop.trf.xlu0
    %v327 = vpop.trf.xlu0
    %v328 = vpop.trf.xlu0
    %v329 = vpop.trf.xlu0
    %v330 = vpop.trf.xlu0
    %v331 = vpop.trf.xlu0
    %v332 = vpop.trf.xlu0
    %v333 = vpop.trf.xlu0
    %v334 = vpop.trf.xlu0
    %v335 = vpop.trf.xlu0
    %v336 = vpop.trf.xlu0
    %v337 = vpop.trf.xlu0
    %v338 = vpop.trf.xlu0
    %v339 = vpop.trf.xlu0
    %340 = vset.pattern.permute.xlu0 0
    %341 = vperm.xlu0 %340, %v231
    %v342 = vpop.permute.xlu0 %341
    %344 = vset.pattern.permute.xlu0 0
    %345 = vperm.xlu0 %344, %v233
    %v346 = vpop.permute.xlu0 %345
    %348 = vset.pattern.permute.xlu0 0
    %349 = vperm.xlu0 %348, %v236
    %v350 = vpop.permute.xlu0 %349
    %352 = vset.pattern.permute.xlu0 0
    %353 = vperm.xlu0 %352, %v238
    %v354 = vpop.permute.xlu0 %353
    %356 = vset.pattern.permute.xlu0 0
    %357 = vperm.xlu0 %356, %v241
    %v358 = vpop.permute.xlu0 %357
    %360 = vset.pattern.permute.xlu0 0
    %361 = vperm.xlu0 %360, %v243
    %v362 = vpop.permute.xlu0 %361
    %364 = vset.pattern.permute.xlu0 0
    %365 = vperm.xlu0 %364, %v246
    %v366 = vpop.permute.xlu0 %365
    %368 = vset.pattern.permute.xlu0 0
    %369 = vperm.xlu0 %368, %v248
    %v370 = vpop.permute.xlu0 %369
    %372 = vset.pattern.permute.xlu0 0
    %373 = vperm.xlu0 %372, %v251
    %v374 = vpop.permute.xlu0 %373
    %376 = vset.pattern.permute.xlu0 0
    %377 = vperm.xlu0 %376, %v253
    %v378 = vpop.permute.xlu0 %377
    %380 = vset.pattern.permute.xlu0 0
    %381 = vperm.xlu0 %380, %v256
    %v382 = vpop.permute.xlu0 %381
    %384 = vset.pattern.permute.xlu0 0
    %385 = vperm.xlu0 %384, %v258
    %v386 = vpop.permute.xlu0 %385
    %v388 = vperm.slane %v324, 0
    %v389 = vadd.f32 %v342, %v388
    %v390 = vadd.f32 %v346, %v388
    %v391 = vadd.f32 %v350, %v388
    %v392 = vadd.f32 %v354, %v388
    %v393 = vadd.f32 %v358, %v388
    %v394 = vadd.f32 %v362, %v388
    %v395 = vadd.f32 %v366, %v388
    %v396 = vadd.f32 %v370, %v388
    %v397 = vadd.f32 %v374, %v388
    %v398 = vadd.f32 %v378, %v388
    %v399 = vadd.f32 %v382, %v388
    %v400 = vadd.f32 %v386, %v388
    %vm401 = vcmp.gt.f32.partialorder %v389, 0.0
    %vm402 = vcmp.gt.f32.partialorder %v390, 0.0
    %vm403 = vcmp.gt.f32.partialorder %v391, 0.0
    %vm404 = vcmp.gt.f32.partialorder %v392, 0.0
    %vm405 = vcmp.gt.f32.partialorder %v393, 0.0
    %vm406 = vcmp.gt.f32.partialorder %v394, 0.0
    %vm407 = vcmp.gt.f32.partialorder %v395, 0.0
    %vm408 = vcmp.gt.f32.partialorder %v396, 0.0
    %vm409 = vcmp.gt.f32.partialorder %v397, 0.0
    %vm410 = vcmp.gt.f32.partialorder %v398, 0.0
    %vm411 = vcmp.gt.f32.partialorder %v399, 0.0
    %vm412 = vcmp.gt.f32.partialorder %v400, 0.0
    %v413 = vmul.f32 %v389, 0.2
    %v414 = vmul.f32 %v390, 0.2
    %v415 = vmul.f32 %v391, 0.2
    %v416 = vmul.f32 %v392, 0.2
    %v417 = vmul.f32 %v393, 0.2
    %v418 = vmul.f32 %v394, 0.2
    %v419 = vmul.f32 %v395, 0.2
    %v420 = vmul.f32 %v396, 0.2
    %v421 = vmul.f32 %v397, 0.2
    %v422 = vmul.f32 %v398, 0.2
    %v423 = vmul.f32 %v399, 0.2
    %v424 = vmul.f32 %v400, 0.2
    %v425 = vsel %vm401, %v389, %v413
    %v426 = vsel %vm402, %v390, %v414
    %v427 = vsel %vm403, %v391, %v415
    %v428 = vsel %vm404, %v392, %v416
    %v429 = vsel %vm405, %v393, %v417
    %v430 = vsel %vm406, %v394, %v418
    %v431 = vsel %vm407, %v395, %v419
    %v432 = vsel %vm408, %v396, %v420
    %v433 = vsel %vm409, %v397, %v421
    %v434 = vsel %vm410, %v398, %v422
    %v435 = vsel %vm411, %v399, %v423
    %v436 = vsel %vm412, %v400, %v424
    %v437 = vadd.f32 %v425, %v32
    %v438 = vadd.f32 %v426, %v33
    %v439 = vadd.f32 %v427, %v34
    %v440 = vadd.f32 %v428, %v35
    %v441 = vadd.f32 %v429, %v36
    %v442 = vadd.f32 %v430, %v37
    %v443 = vadd.f32 %v431, %v38
    %v444 = vadd.f32 %v432, %v39
    %v445 = vadd.f32 %v433, %v40
    %v446 = vadd.f32 %v434, %v41
    %v447 = vadd.f32 %v435, %v42
    %v448 = vadd.f32 %v436, %v43
    %vm449 = vcmask 785408
    %v450 = vsel %vm449, %v437, -inf
    %451 = vmax.xlane.f32.xlu0 %v450
    %v452 = vpop.xlane.xlu0 %451
    %v453 = vsel %vm449, %v438, -inf
    %454 = vmax.xlane.f32.xlu0 %v453
    %v455 = vpop.xlane.xlu0 %454
    %v456 = vsel %vm449, %v439, -inf
    %457 = vmax.xlane.f32.xlu0 %v456
    %v458 = vpop.xlane.xlu0 %457
    %v459 = vsel %vm449, %v440, -inf
    %460 = vmax.xlane.f32.xlu0 %v459
    %v461 = vpop.xlane.xlu0 %460
    %v462 = vsel %vm449, %v441, -inf
    %463 = vmax.xlane.f32.xlu0 %v462
    %v464 = vpop.xlane.xlu0 %463
    %v465 = vsel %vm449, %v442, -inf
    %466 = vmax.xlane.f32.xlu0 %v465
    %v467 = vpop.xlane.xlu0 %466
    %v468 = vsel %vm449, %v443, -inf
    %469 = vmax.xlane.f32.xlu0 %v468
    %v470 = vpop.xlane.xlu0 %469
    %v471 = vsel %vm449, %v444, -inf
    %472 = vmax.xlane.f32.xlu0 %v471
    %v473 = vpop.xlane.xlu0 %472
    %v474 = vsel %vm449, %v445, -inf
    %475 = vmax.xlane.f32.xlu0 %v474
    %v476 = vpop.xlane.xlu0 %475
    %v477 = vsel %vm449, %v446, -inf
    %478 = vmax.xlane.f32.xlu0 %v477
    %v479 = vpop.xlane.xlu0 %478
    %v480 = vsel %vm449, %v447, -inf
    %481 = vmax.xlane.f32.xlu0 %v480
    %v482 = vpop.xlane.xlu0 %481
    %v483 = vsel %vm449, %v448, -inf
    %484 = vmax.xlane.f32.xlu0 %v483
    %v485 = vpop.xlane.xlu0 %484
    %v486 = vsub.f32 %v437, %v452
    %v487 = vsub.f32 %v438, %v455
    %v488 = vsub.f32 %v439, %v458
    %v489 = vsub.f32 %v440, %v461
    %v490 = vsub.f32 %v441, %v464
    %v491 = vsub.f32 %v442, %v467
    %v492 = vsub.f32 %v443, %v470
    %v493 = vsub.f32 %v444, %v473
    %v494 = vsub.f32 %v445, %v476
    %v495 = vsub.f32 %v446, %v479
    %v496 = vsub.f32 %v447, %v482
    %v497 = vsub.f32 %v448, %v485
    %v498 = vmul.f32 %v486, 1.442695
    %v499 = vpow.pop %v498
    %v500 = vmul.f32 %v487, 1.442695
    %v501 = vpow.pop %v500
    %v502 = vmul.f32 %v488, 1.442695
    %v503 = vpow.pop %v502
    %v504 = vmul.f32 %v489, 1.442695
    %v505 = vpow.pop %v504
    %v506 = vmul.f32 %v490, 1.442695
    %v507 = vpow.pop %v506
    %v508 = vmul.f32 %v491, 1.442695
    %v509 = vpow.pop %v508
    %v510 = vmul.f32 %v492, 1.442695
    %v511 = vpow.pop %v510
    %v512 = vmul.f32 %v493, 1.442695
    %v513 = vpow.pop %v512
    %v514 = vmul.f32 %v494, 1.442695
    %v515 = vpow.pop %v514
    %v516 = vmul.f32 %v495, 1.442695
    %v517 = vpow.pop %v516
    %v518 = vmul.f32 %v496, 1.442695
    %v519 = vpow.pop %v518
    %v520 = vmul.f32 %v497, 1.442695
    %v521 = vpow.pop %v520
    %v522 = vsel %vm449, %v499, 0.0
    %523 = vadd.xlane.f32.xlu0 %v522
    %v524 = vpop.xlane.xlu0 %523
    %v525 = vsel %vm449, %v501, 0.0
    %526 = vadd.xlane.f32.xlu0 %v525
    %v527 = vpop.xlane.xlu0 %526
    %v528 = vsel %vm449, %v503, 0.0
    %529 = vadd.xlane.f32.xlu0 %v528
    %v530 = vpop.xlane.xlu0 %529
    %v531 = vsel %vm449, %v505, 0.0
    %532 = vadd.xlane.f32.xlu0 %v531
    %v533 = vpop.xlane.xlu0 %532
    %v534 = vsel %vm449, %v507, 0.0
    %535 = vadd.xlane.f32.xlu0 %v534
    %v536 = vpop.xlane.xlu0 %535
    %v537 = vsel %vm449, %v509, 0.0
    %538 = vadd.xlane.f32.xlu0 %v537
    %v539 = vpop.xlane.xlu0 %538
    %v540 = vsel %vm449, %v511, 0.0
    %541 = vadd.xlane.f32.xlu0 %v540
    %v542 = vpop.xlane.xlu0 %541
    %v543 = vsel %vm449, %v513, 0.0
    %544 = vadd.xlane.f32.xlu0 %v543
    %v545 = vpop.xlane.xlu0 %544
    %v546 = vsel %vm449, %v515, 0.0
    %547 = vadd.xlane.f32.xlu0 %v546
    %v548 = vpop.xlane.xlu0 %547
    %v549 = vsel %vm449, %v517, 0.0
    %550 = vadd.xlane.f32.xlu0 %v549
    %v551 = vpop.xlane.xlu0 %550
    %v552 = vsel %vm449, %v519, 0.0
    %553 = vadd.xlane.f32.xlu0 %v552
    %v554 = vpop.xlane.xlu0 %553
    %v555 = vsel %vm449, %v521, 0.0
    %556 = vadd.xlane.f32.xlu0 %v555
    %v557 = vpop.xlane.xlu0 %556
    %v558 = vmax.f32 %v524, 1e-20
    %v559 = vmax.f32 %v527, 1e-20
    %v560 = vmax.f32 %v530, 1e-20
    %v561 = vmax.f32 %v533, 1e-20
    %v562 = vmax.f32 %v536, 1e-20
    %v563 = vmax.f32 %v539, 1e-20
    %v564 = vmax.f32 %v542, 1e-20
    %v565 = vmax.f32 %v545, 1e-20
    %v566 = vmax.f32 %v548, 1e-20
    %v567 = vmax.f32 %v551, 1e-20
    %v568 = vmax.f32 %v554, 1e-20
    %v569 = vmax.f32 %v557, 1e-20
    %v570 = vrcp.pop %v558
    %v571 = vrcp.pop %v559
    %v572 = vrcp.pop %v560
    %v573 = vrcp.pop %v561
    %v574 = vrcp.pop %v562
    %v575 = vrcp.pop %v563
    %v576 = vrcp.pop %v564
    %v577 = vrcp.pop %v565
    %v578 = vrcp.pop %v566
    %v579 = vrcp.pop %v567
    %v580 = vrcp.pop %v568
    %v581 = vrcp.pop %v569
    %v582 = vpack.c.bf16 %v501, %v499
    %v583 = vpack.c.bf16 %v505, %v503
    %v584 = vpack.c.bf16 %v509, %v507
    %v585 = vpack.c.bf16 %v513, %v511
    %v586 = vpack.c.bf16 %v517, %v515
    %v587 = vpack.c.bf16 %v521, %v519
    %v595 = vsel %vm449, %v582, 0
    %v598 = vsel %vm449, %v583, 0
    %v601 = vsel %vm449, %v584, 0
    %v604 = vsel %vm449, %v585, 0
    %v607 = vsel %vm449, %v586, 0
    %v610 = vsel %vm449, %v587, 0
    %612 = vmatpush.bf16.msra.mxu0 0
    %613 = vmatpush.bf16.msra.mxu0 0
    %614 = vmatpush.bf16.msra.mxu0 %v195
    %615 = vmatpush.bf16.msra.mxu0 %v194
    %616 = vmatpush.bf16.msra.mxu0 %v193
    %617 = vmatpush.bf16.msra.mxu0 %v192
    %618 = vmatpush.bf16.msra.mxu0 %v191
    %619 = vmatpush.bf16.msra.mxu0 %v190
    %620 = vmatmul.bf16.gmra.mxu0 %v595
    %v621 = vpop.f32.mrf.mxu0
    %v622 = vadd.f32 0.0, %v621
    %v623 = vpop.f32.mrf.mxu0
    %v624 = vadd.f32 0.0, %v623
    %625 = vmatmul.bf16.gmra.mxu0 %v598
    %v626 = vpop.f32.mrf.mxu0
    %v627 = vadd.f32 0.0, %v626
    %v628 = vpop.f32.mrf.mxu0
    %v629 = vadd.f32 0.0, %v628
    %630 = vmatmul.bf16.gmra.mxu0 %v601
    %v631 = vpop.f32.mrf.mxu0
    %v632 = vadd.f32 0.0, %v631
    %v633 = vpop.f32.mrf.mxu0
    %v634 = vadd.f32 0.0, %v633
    %635 = vmatmul.bf16.gmra.mxu0 %v604
    %v636 = vpop.f32.mrf.mxu0
    %v637 = vadd.f32 0.0, %v636
    %v638 = vpop.f32.mrf.mxu0
    %v639 = vadd.f32 0.0, %v638
    %640 = vmatmul.bf16.gmra.mxu0 %v607
    %v641 = vpop.f32.mrf.mxu0
    %v642 = vadd.f32 0.0, %v641
    %v643 = vpop.f32.mrf.mxu0
    %v644 = vadd.f32 0.0, %v643
    %645 = vmatmul.bf16.gmra.mxu0 %v610
    %v646 = vpop.f32.mrf.mxu0
    %v647 = vadd.f32 0.0, %v646
    %v648 = vpop.f32.mrf.mxu0
    %v649 = vadd.f32 0.0, %v648
    %650 = vdwg.mxu0
    %v651 = vmul.f32 %v622, %v570
    %v652 = vmul.f32 %v624, %v571
    %v653 = vmul.f32 %v627, %v572
    %v654 = vmul.f32 %v629, %v573
    %v655 = vmul.f32 %v632, %v574
    %v656 = vmul.f32 %v634, %v575
    %v657 = vmul.f32 %v637, %v576
    %v658 = vmul.f32 %v639, %v577
    %v659 = vmul.f32 %v642, %v578
    %v660 = vmul.f32 %v644, %v579
    %v661 = vmul.f32 %v647, %v580
    %v662 = vmul.f32 %v649, %v581
    %v663 = vld [vmem:[%s2 + $0xc] sm:$0x1]
    %v664 = vunpack.c.l.bf16 %v663
    %v665 = vperm.slane %v664, 0
    %v666 = vadd.f32 %v651, %v665
    %v667 = vadd.f32 %v652, %v665
    %v668 = vadd.f32 %v653, %v665
    %v669 = vadd.f32 %v654, %v665
    %v670 = vadd.f32 %v655, %v665
    %v671 = vadd.f32 %v656, %v665
    %v672 = vadd.f32 %v657, %v665
    %v673 = vadd.f32 %v658, %v665
    %v674 = vadd.f32 %v659, %v665
    %v675 = vadd.f32 %v660, %v665
    %v676 = vadd.f32 %v661, %v665
    %v677 = vadd.f32 %v662, %v665
    %vm678 = vcmp.gt.f32.partialorder %v666, 0.0
    %vm679 = vcmp.gt.f32.partialorder %v667, 0.0
    %vm680 = vcmp.gt.f32.partialorder %v668, 0.0
    %vm681 = vcmp.gt.f32.partialorder %v669, 0.0
    %vm682 = vcmp.gt.f32.partialorder %v670, 0.0
    %vm683 = vcmp.gt.f32.partialorder %v671, 0.0
    %vm684 = vcmp.gt.f32.partialorder %v672, 0.0
    %vm685 = vcmp.gt.f32.partialorder %v673, 0.0
    %vm686 = vcmp.gt.f32.partialorder %v674, 0.0
    %vm687 = vcmp.gt.f32.partialorder %v675, 0.0
    %vm688 = vcmp.gt.f32.partialorder %v676, 0.0
    %vm689 = vcmp.gt.f32.partialorder %v677, 0.0
    %v690 = vmin.f32 %v666, 0.0
    %v691 = vmin.f32 %v667, 0.0
    %v692 = vmin.f32 %v668, 0.0
    %v693 = vmin.f32 %v669, 0.0
    %v694 = vmin.f32 %v670, 0.0
    %v695 = vmin.f32 %v671, 0.0
    %v696 = vmin.f32 %v672, 0.0
    %v697 = vmin.f32 %v673, 0.0
    %v698 = vmin.f32 %v674, 0.0
    %v699 = vmin.f32 %v675, 0.0
    %v700 = vmin.f32 %v676, 0.0
    %v701 = vmin.f32 %v677, 0.0
    %v702 = vmul.f32 %v690, 1.442695
    %v703 = vpow.pop %v702
    %v704 = vmul.f32 %v691, 1.442695
    %v705 = vpow.pop %v704
    %v706 = vmul.f32 %v692, 1.442695
    %v707 = vpow.pop %v706
    %v708 = vmul.f32 %v693, 1.442695
    %v709 = vpow.pop %v708
    %v710 = vmul.f32 %v694, 1.442695
    %v711 = vpow.pop %v710
    %v712 = vmul.f32 %v695, 1.442695
    %v713 = vpow.pop %v712
    %v714 = vmul.f32 %v696, 1.442695
    %v715 = vpow.pop %v714
    %v716 = vmul.f32 %v697, 1.442695
    %v717 = vpow.pop %v716
    %v718 = vmul.f32 %v698, 1.442695
    %v719 = vpow.pop %v718
    %v720 = vmul.f32 %v699, 1.442695
    %v721 = vpow.pop %v720
    %v722 = vmul.f32 %v700, 1.442695
    %v723 = vpow.pop %v722
    %v724 = vmul.f32 %v701, 1.442695
    %v725 = vpow.pop %v724
    %v726 = vsub.f32 %v703, 1.0
    %v727 = vsub.f32 %v705, 1.0
    %v728 = vsub.f32 %v707, 1.0
    %v729 = vsub.f32 %v709, 1.0
    %v730 = vsub.f32 %v711, 1.0
    %v731 = vsub.f32 %v713, 1.0
    %v732 = vsub.f32 %v715, 1.0
    %v733 = vsub.f32 %v717, 1.0
    %v734 = vsub.f32 %v719, 1.0
    %v735 = vsub.f32 %v721, 1.0
    %v736 = vsub.f32 %v723, 1.0
    %v737 = vsub.f32 %v725, 1.0
    %v738 = vsel %vm678, %v666, %v726
    %v739 = vsel %vm679, %v667, %v727
    %v740 = vsel %vm680, %v668, %v728
    %v741 = vsel %vm681, %v669, %v729
    %v742 = vsel %vm682, %v670, %v730
    %v743 = vsel %vm683, %v671, %v731
    %v744 = vsel %vm684, %v672, %v732
    %v745 = vsel %vm685, %v673, %v733
    %v746 = vsel %vm686, %v674, %v734
    %v747 = vsel %vm687, %v675, %v735
    %v748 = vsel %vm688, %v676, %v736
    %v749 = vsel %vm689, %v677, %v737
    %v750 = vld [vmem:[%s2 + $0x10] sm:$0xf]
    %v751 = vpack.c.bf16 %v739, %v738
    %v752 = vpack.c.bf16 %v741, %v740
    %v753 = vpack.c.bf16 %v743, %v742
    %v754 = vpack.c.bf16 %v745, %v744
    %v755 = vpack.c.bf16 %v747, %v746
    %v756 = vpack.c.bf16 %v749, %v748
    %757 = vrot.lane.b32.xlu0 %v231, 125
    %v758 = vpop.permute.xlu0 %757
    %759 = vrot.lane.b32.xlu0 %v233, 125
    %v760 = vpop.permute.xlu0 %759
    %761 = vrot.lane.b32.xlu0 %v236, 125
    %v762 = vpop.permute.xlu0 %761
    %763 = vrot.lane.b32.xlu0 %v238, 125
    %v764 = vpop.permute.xlu0 %763
    %765 = vrot.lane.b32.xlu0 %v241, 125
    %v766 = vpop.permute.xlu0 %765
    %767 = vrot.lane.b32.xlu0 %v243, 125
    %v768 = vpop.permute.xlu0 %767
    %769 = vrot.lane.b32.xlu0 %v246, 125
    %v770 = vpop.permute.xlu0 %769
    %771 = vrot.lane.b32.xlu0 %v248, 125
    %v772 = vpop.permute.xlu0 %771
    %773 = vrot.lane.b32.xlu0 %v251, 125
    %v774 = vpop.permute.xlu0 %773
    %775 = vrot.lane.b32.xlu0 %v253, 125
    %v776 = vpop.permute.xlu0 %775
    %777 = vrot.lane.b32.xlu0 %v256, 125
    %v778 = vpop.permute.xlu0 %777
    %779 = vrot.lane.b32.xlu0 %v258, 125
    %v780 = vpop.permute.xlu0 %779
    %793 = vxpose.xlu0.b32.start [1/16] %v758, 128
    %794 = vxpose.xlu0.b32.cont [2/16] %v760, 128
    %795 = vxpose.xlu0.b32.cont [3/16] %v762, 128
    %796 = vxpose.xlu0.b32.cont [4/16] %v764, 128
    %797 = vxpose.xlu0.b32.cont [5/16] %v766, 128
    %798 = vxpose.xlu0.b32.cont [6/16] %v768, 128
    %799 = vxpose.xlu0.b32.cont [7/16] %v770, 128
    %800 = vxpose.xlu0.b32.cont [8/16] %v772, 128
    %801 = vxpose.xlu0.b32.cont [9/16] %v774, 128
    %802 = vxpose.xlu0.b32.cont [10/16] %v776, 128
    %803 = vxpose.xlu0.b32.cont [11/16] %v778, 128
    %804 = vxpose.xlu0.b32.cont [12/16] %v780, 128
    %805 = vxpose.xlu0.b32.cont [13/16] 0.0, 128
    %806 = vxpose.xlu0.b32.cont [14/16] 0.0, 128
    %807 = vxpose.xlu0.b32.cont [15/16] 0.0, 128
    %808 = vxpose.xlu0.b32.end [16/16] 0.0, 128
    %v809 = vpop.trf.xlu0
    %v810 = vpop.trf.xlu0
    %v811 = vpop.trf.xlu0
    %v812 = vpop.trf.xlu0
    %v813 = vpop.trf.xlu0
    %v814 = vpop.trf.xlu0
    %v815 = vpop.trf.xlu0
    %v816 = vpop.trf.xlu0
    %v817 = vpop.trf.xlu0
    %v818 = vpop.trf.xlu0
    %v819 = vpop.trf.xlu0
    %v820 = vpop.trf.xlu0
    %v821 = vpop.trf.xlu0
    %v822 = vpop.trf.xlu0
    %v823 = vpop.trf.xlu0
    %v824 = vpop.trf.xlu0
    %825 = vset.pattern.permute.xlu0 2
    %826 = vperm.xlu0 %825, %v231
    %v827 = vpop.permute.xlu0 %826
    %829 = vset.pattern.permute.xlu0 2
    %830 = vperm.xlu0 %829, %v233
    %v831 = vpop.permute.xlu0 %830
    %833 = vset.pattern.permute.xlu0 2
    %834 = vperm.xlu0 %833, %v236
    %v835 = vpop.permute.xlu0 %834
    %837 = vset.pattern.permute.xlu0 2
    %838 = vperm.xlu0 %837, %v238
    %v839 = vpop.permute.xlu0 %838
    %841 = vset.pattern.permute.xlu0 2
    %842 = vperm.xlu0 %841, %v241
    %v843 = vpop.permute.xlu0 %842
    %845 = vset.pattern.permute.xlu0 2
    %846 = vperm.xlu0 %845, %v243
    %v847 = vpop.permute.xlu0 %846
    %849 = vset.pattern.permute.xlu0 2
    %850 = vperm.xlu0 %849, %v246
    %v851 = vpop.permute.xlu0 %850
    %853 = vset.pattern.permute.xlu0 2
    %854 = vperm.xlu0 %853, %v248
    %v855 = vpop.permute.xlu0 %854
    %857 = vset.pattern.permute.xlu0 2
    %858 = vperm.xlu0 %857, %v251
    %v859 = vpop.permute.xlu0 %858
    %861 = vset.pattern.permute.xlu0 2
    %862 = vperm.xlu0 %861, %v253
    %v863 = vpop.permute.xlu0 %862
    %865 = vset.pattern.permute.xlu0 2
    %866 = vperm.xlu0 %865, %v256
    %v867 = vpop.permute.xlu0 %866
    %869 = vset.pattern.permute.xlu0 2
    %870 = vperm.xlu0 %869, %v258
    %v871 = vpop.permute.xlu0 %870
    %v873 = vperm.slane %v809, 0
    %v874 = vadd.f32 %v827, %v873
    %v875 = vadd.f32 %v831, %v873
    %v876 = vadd.f32 %v835, %v873
    %v877 = vadd.f32 %v839, %v873
    %v878 = vadd.f32 %v843, %v873
    %v879 = vadd.f32 %v847, %v873
    %v880 = vadd.f32 %v851, %v873
    %v881 = vadd.f32 %v855, %v873
    %v882 = vadd.f32 %v859, %v873
    %v883 = vadd.f32 %v863, %v873
    %v884 = vadd.f32 %v867, %v873
    %v885 = vadd.f32 %v871, %v873
    %vm886 = vcmp.gt.f32.partialorder %v874, 0.0
    %vm887 = vcmp.gt.f32.partialorder %v875, 0.0
    %vm888 = vcmp.gt.f32.partialorder %v876, 0.0
    %vm889 = vcmp.gt.f32.partialorder %v877, 0.0
    %vm890 = vcmp.gt.f32.partialorder %v878, 0.0
    %vm891 = vcmp.gt.f32.partialorder %v879, 0.0
    %vm892 = vcmp.gt.f32.partialorder %v880, 0.0
    %vm893 = vcmp.gt.f32.partialorder %v881, 0.0
    %vm894 = vcmp.gt.f32.partialorder %v882, 0.0
    %vm895 = vcmp.gt.f32.partialorder %v883, 0.0
    %vm896 = vcmp.gt.f32.partialorder %v884, 0.0
    %vm897 = vcmp.gt.f32.partialorder %v885, 0.0
    %v898 = vmul.f32 %v874, 0.2
    %v899 = vmul.f32 %v875, 0.2
    %v900 = vmul.f32 %v876, 0.2
    %v901 = vmul.f32 %v877, 0.2
    %v902 = vmul.f32 %v878, 0.2
    %v903 = vmul.f32 %v879, 0.2
    %v904 = vmul.f32 %v880, 0.2
    %v905 = vmul.f32 %v881, 0.2
    %v906 = vmul.f32 %v882, 0.2
    %v907 = vmul.f32 %v883, 0.2
    %v908 = vmul.f32 %v884, 0.2
    %v909 = vmul.f32 %v885, 0.2
    %v910 = vsel %vm886, %v874, %v898
    %v911 = vsel %vm887, %v875, %v899
    %v912 = vsel %vm888, %v876, %v900
    %v913 = vsel %vm889, %v877, %v901
    %v914 = vsel %vm890, %v878, %v902
    %v915 = vsel %vm891, %v879, %v903
    %v916 = vsel %vm892, %v880, %v904
    %v917 = vsel %vm893, %v881, %v905
    %v918 = vsel %vm894, %v882, %v906
    %v919 = vsel %vm895, %v883, %v907
    %v920 = vsel %vm896, %v884, %v908
    %v921 = vsel %vm897, %v885, %v909
    %v922 = vadd.f32 %v910, %v32
    %v923 = vadd.f32 %v911, %v33
    %v924 = vadd.f32 %v912, %v34
    %v925 = vadd.f32 %v913, %v35
    %v926 = vadd.f32 %v914, %v36
    %v927 = vadd.f32 %v915, %v37
    %v928 = vadd.f32 %v916, %v38
    %v929 = vadd.f32 %v917, %v39
    %v930 = vadd.f32 %v918, %v40
    %v931 = vadd.f32 %v919, %v41
    %v932 = vadd.f32 %v920, %v42
    %v933 = vadd.f32 %v921, %v43
    %v934 = vsel %vm449, %v922, -inf
    %935 = vmax.xlane.f32.xlu0 %v934
    %v936 = vpop.xlane.xlu0 %935
    %v937 = vsel %vm449, %v923, -inf
    %938 = vmax.xlane.f32.xlu0 %v937
    %v939 = vpop.xlane.xlu0 %938
    %v940 = vsel %vm449, %v924, -inf
    %941 = vmax.xlane.f32.xlu0 %v940
    %v942 = vpop.xlane.xlu0 %941
    %v943 = vsel %vm449, %v925, -inf
    %944 = vmax.xlane.f32.xlu0 %v943
    %v945 = vpop.xlane.xlu0 %944
    %v946 = vsel %vm449, %v926, -inf
    %947 = vmax.xlane.f32.xlu0 %v946
    %v948 = vpop.xlane.xlu0 %947
    %v949 = vsel %vm449, %v927, -inf
    %950 = vmax.xlane.f32.xlu0 %v949
    %v951 = vpop.xlane.xlu0 %950
    %v952 = vsel %vm449, %v928, -inf
    %953 = vmax.xlane.f32.xlu0 %v952
    %v954 = vpop.xlane.xlu0 %953
    %v955 = vsel %vm449, %v929, -inf
    %956 = vmax.xlane.f32.xlu0 %v955
    %v957 = vpop.xlane.xlu0 %956
    %v958 = vsel %vm449, %v930, -inf
    %959 = vmax.xlane.f32.xlu0 %v958
    %v960 = vpop.xlane.xlu0 %959
    %v961 = vsel %vm449, %v931, -inf
    %962 = vmax.xlane.f32.xlu0 %v961
    %v963 = vpop.xlane.xlu0 %962
    %v964 = vsel %vm449, %v932, -inf
    %965 = vmax.xlane.f32.xlu0 %v964
    %v966 = vpop.xlane.xlu0 %965
    %v967 = vsel %vm449, %v933, -inf
    %968 = vmax.xlane.f32.xlu0 %v967
    %v969 = vpop.xlane.xlu0 %968
    %v970 = vsub.f32 %v922, %v936
    %v971 = vsub.f32 %v923, %v939
    %v972 = vsub.f32 %v924, %v942
    %v973 = vsub.f32 %v925, %v945
    %v974 = vsub.f32 %v926, %v948
    %v975 = vsub.f32 %v927, %v951
    %v976 = vsub.f32 %v928, %v954
    %v977 = vsub.f32 %v929, %v957
    %v978 = vsub.f32 %v930, %v960
    %v979 = vsub.f32 %v931, %v963
    %v980 = vsub.f32 %v932, %v966
    %v981 = vsub.f32 %v933, %v969
    %v982 = vmul.f32 %v970, 1.442695
    %v983 = vpow.pop %v982
    %v984 = vmul.f32 %v971, 1.442695
    %v985 = vpow.pop %v984
    %v986 = vmul.f32 %v972, 1.442695
    %v987 = vpow.pop %v986
    %v988 = vmul.f32 %v973, 1.442695
    %v989 = vpow.pop %v988
    %v990 = vmul.f32 %v974, 1.442695
    %v991 = vpow.pop %v990
    %v992 = vmul.f32 %v975, 1.442695
    %v993 = vpow.pop %v992
    %v994 = vmul.f32 %v976, 1.442695
    %v995 = vpow.pop %v994
    %v996 = vmul.f32 %v977, 1.442695
    %v997 = vpow.pop %v996
    %v998 = vmul.f32 %v978, 1.442695
    %v999 = vpow.pop %v998
    %v1000 = vmul.f32 %v979, 1.442695
    %v1001 = vpow.pop %v1000
    %v1002 = vmul.f32 %v980, 1.442695
    %v1003 = vpow.pop %v1002
    %v1004 = vmul.f32 %v981, 1.442695
    %v1005 = vpow.pop %v1004
    %v1006 = vsel %vm449, %v983, 0.0
    %1007 = vadd.xlane.f32.xlu0 %v1006
    %v1008 = vpop.xlane.xlu0 %1007
    %v1009 = vsel %vm449, %v985, 0.0
    %1010 = vadd.xlane.f32.xlu0 %v1009
    %v1011 = vpop.xlane.xlu0 %1010
    %v1012 = vsel %vm449, %v987, 0.0
    %1013 = vadd.xlane.f32.xlu0 %v1012
    %v1014 = vpop.xlane.xlu0 %1013
    %v1015 = vsel %vm449, %v989, 0.0
    %1016 = vadd.xlane.f32.xlu0 %v1015
    %v1017 = vpop.xlane.xlu0 %1016
    %v1018 = vsel %vm449, %v991, 0.0
    %1019 = vadd.xlane.f32.xlu0 %v1018
    %v1020 = vpop.xlane.xlu0 %1019
    %v1021 = vsel %vm449, %v993, 0.0
    %1022 = vadd.xlane.f32.xlu0 %v1021
    %v1023 = vpop.xlane.xlu0 %1022
    %v1024 = vsel %vm449, %v995, 0.0
    %1025 = vadd.xlane.f32.xlu0 %v1024
    %v1026 = vpop.xlane.xlu0 %1025
    %v1027 = vsel %vm449, %v997, 0.0
    %1028 = vadd.xlane.f32.xlu0 %v1027
    %v1029 = vpop.xlane.xlu0 %1028
    %v1030 = vsel %vm449, %v999, 0.0
    %1031 = vadd.xlane.f32.xlu0 %v1030
    %v1032 = vpop.xlane.xlu0 %1031
    %v1033 = vsel %vm449, %v1001, 0.0
    %1034 = vadd.xlane.f32.xlu0 %v1033
    %v1035 = vpop.xlane.xlu0 %1034
    %v1036 = vsel %vm449, %v1003, 0.0
    %1037 = vadd.xlane.f32.xlu0 %v1036
    %v1038 = vpop.xlane.xlu0 %1037
    %v1039 = vsel %vm449, %v1005, 0.0
    %1040 = vadd.xlane.f32.xlu0 %v1039
    %v1041 = vpop.xlane.xlu0 %1040
    %v1042 = vmax.f32 %v1008, 1e-20
    %v1043 = vmax.f32 %v1011, 1e-20
    %v1044 = vmax.f32 %v1014, 1e-20
    %v1045 = vmax.f32 %v1017, 1e-20
    %v1046 = vmax.f32 %v1020, 1e-20
    %v1047 = vmax.f32 %v1023, 1e-20
    %v1048 = vmax.f32 %v1026, 1e-20
    %v1049 = vmax.f32 %v1029, 1e-20
    %v1050 = vmax.f32 %v1032, 1e-20
    %v1051 = vmax.f32 %v1035, 1e-20
    %v1052 = vmax.f32 %v1038, 1e-20
    %v1053 = vmax.f32 %v1041, 1e-20
    %v1054 = vrcp.pop %v1042
    %v1055 = vrcp.pop %v1043
    %v1056 = vrcp.pop %v1044
    %v1057 = vrcp.pop %v1045
    %v1058 = vrcp.pop %v1046
    %v1059 = vrcp.pop %v1047
    %v1060 = vrcp.pop %v1048
    %v1061 = vrcp.pop %v1049
    %v1062 = vrcp.pop %v1050
    %v1063 = vrcp.pop %v1051
    %v1064 = vrcp.pop %v1052
    %v1065 = vrcp.pop %v1053
    %v1066 = vpack.c.bf16 %v985, %v983
    %v1067 = vpack.c.bf16 %v989, %v987
    %v1068 = vpack.c.bf16 %v993, %v991
    %v1069 = vpack.c.bf16 %v997, %v995
    %v1070 = vpack.c.bf16 %v1001, %v999
    %v1071 = vpack.c.bf16 %v1005, %v1003
    %1072 = vrot.lane.b32.xlu0 %v190, 120
    %v1073 = vpop.permute.xlu0 %1072
    %1074 = vrot.lane.b32.xlu0 %v191, 120
    %v1075 = vpop.permute.xlu0 %1074
    %1076 = vrot.lane.b32.xlu0 %v192, 120
    %v1077 = vpop.permute.xlu0 %1076
    %1078 = vrot.lane.b32.xlu0 %v193, 120
    %v1079 = vpop.permute.xlu0 %1078
    %1080 = vrot.lane.b32.xlu0 %v194, 120
    %v1081 = vpop.permute.xlu0 %1080
    %1082 = vrot.lane.b32.xlu0 %v195, 120
    %v1083 = vpop.permute.xlu0 %1082
    %v1091 = vsel %vm449, %v1066, 0
    %v1094 = vsel %vm449, %v1067, 0
    %v1097 = vsel %vm449, %v1068, 0
    %v1100 = vsel %vm449, %v1069, 0
    %v1103 = vsel %vm449, %v1070, 0
    %v1106 = vsel %vm449, %v1071, 0
    %1108 = vmatpush.bf16.msra.mxu0 0
    %1109 = vmatpush.bf16.msra.mxu0 0
    %1110 = vmatpush.bf16.msra.mxu0 %v1083
    %1111 = vmatpush.bf16.msra.mxu0 %v1081
    %1112 = vmatpush.bf16.msra.mxu0 %v1079
    %1113 = vmatpush.bf16.msra.mxu0 %v1077
    %1114 = vmatpush.bf16.msra.mxu0 %v1075
    %1115 = vmatpush.bf16.msra.mxu0 %v1073
    %1116 = vmatmul.bf16.gmra.mxu0 %v1091
    %v1117 = vpop.f32.mrf.mxu0
    %v1118 = vadd.f32 0.0, %v1117
    %v1119 = vpop.f32.mrf.mxu0
    %v1120 = vadd.f32 0.0, %v1119
    %1121 = vmatmul.bf16.gmra.mxu0 %v1094
    %v1122 = vpop.f32.mrf.mxu0
    %v1123 = vadd.f32 0.0, %v1122
    %v1124 = vpop.f32.mrf.mxu0
    %v1125 = vadd.f32 0.0, %v1124
    %1126 = vmatmul.bf16.gmra.mxu0 %v1097
    %v1127 = vpop.f32.mrf.mxu0
    %v1128 = vadd.f32 0.0, %v1127
    %v1129 = vpop.f32.mrf.mxu0
    %v1130 = vadd.f32 0.0, %v1129
    %1131 = vmatmul.bf16.gmra.mxu0 %v1100
    %v1132 = vpop.f32.mrf.mxu0
    %v1133 = vadd.f32 0.0, %v1132
    %v1134 = vpop.f32.mrf.mxu0
    %v1135 = vadd.f32 0.0, %v1134
    %1136 = vmatmul.bf16.gmra.mxu0 %v1103
    %v1137 = vpop.f32.mrf.mxu0
    %v1138 = vadd.f32 0.0, %v1137
    %v1139 = vpop.f32.mrf.mxu0
    %v1140 = vadd.f32 0.0, %v1139
    %1141 = vmatmul.bf16.gmra.mxu0 %v1106
    %v1142 = vpop.f32.mrf.mxu0
    %v1143 = vadd.f32 0.0, %v1142
    %v1144 = vpop.f32.mrf.mxu0
    %v1145 = vadd.f32 0.0, %v1144
    %1146 = vdwg.mxu0
    %v1147 = vmul.f32 %v1118, %v1054
    %v1148 = vmul.f32 %v1120, %v1055
    %v1149 = vmul.f32 %v1123, %v1056
    %v1150 = vmul.f32 %v1125, %v1057
    %v1151 = vmul.f32 %v1128, %v1058
    %v1152 = vmul.f32 %v1130, %v1059
    %v1153 = vmul.f32 %v1133, %v1060
    %v1154 = vmul.f32 %v1135, %v1061
    %v1155 = vmul.f32 %v1138, %v1062
    %v1156 = vmul.f32 %v1140, %v1063
    %v1157 = vmul.f32 %v1143, %v1064
    %v1158 = vmul.f32 %v1145, %v1065
    %1160 = vrot.lane.b32.xlu0 %v665, 120
    %v1161 = vpop.permute.xlu0 %1160
    %v1163 = vadd.f32 %v1147, %v1161
    %v1164 = vadd.f32 %v1148, %v1161
    %v1165 = vadd.f32 %v1149, %v1161
    %v1166 = vadd.f32 %v1150, %v1161
    %v1167 = vadd.f32 %v1151, %v1161
    %v1168 = vadd.f32 %v1152, %v1161
    %v1169 = vadd.f32 %v1153, %v1161
    %v1170 = vadd.f32 %v1154, %v1161
    %v1171 = vadd.f32 %v1155, %v1161
    %v1172 = vadd.f32 %v1156, %v1161
    %v1173 = vadd.f32 %v1157, %v1161
    %v1174 = vadd.f32 %v1158, %v1161
    %vm1175 = vcmp.gt.f32.partialorder %v1163, 0.0
    %vm1176 = vcmp.gt.f32.partialorder %v1164, 0.0
    %vm1177 = vcmp.gt.f32.partialorder %v1165, 0.0
    %vm1178 = vcmp.gt.f32.partialorder %v1166, 0.0
    %vm1179 = vcmp.gt.f32.partialorder %v1167, 0.0
    %vm1180 = vcmp.gt.f32.partialorder %v1168, 0.0
    %vm1181 = vcmp.gt.f32.partialorder %v1169, 0.0
    %vm1182 = vcmp.gt.f32.partialorder %v1170, 0.0
    %vm1183 = vcmp.gt.f32.partialorder %v1171, 0.0
    %vm1184 = vcmp.gt.f32.partialorder %v1172, 0.0
    %vm1185 = vcmp.gt.f32.partialorder %v1173, 0.0
    %vm1186 = vcmp.gt.f32.partialorder %v1174, 0.0
    %v1187 = vmin.f32 %v1163, 0.0
    %v1188 = vmin.f32 %v1164, 0.0
    %v1189 = vmin.f32 %v1165, 0.0
    %v1190 = vmin.f32 %v1166, 0.0
    %v1191 = vmin.f32 %v1167, 0.0
    %v1192 = vmin.f32 %v1168, 0.0
    %v1193 = vmin.f32 %v1169, 0.0
    %v1194 = vmin.f32 %v1170, 0.0
    %v1195 = vmin.f32 %v1171, 0.0
    %v1196 = vmin.f32 %v1172, 0.0
    %v1197 = vmin.f32 %v1173, 0.0
    %v1198 = vmin.f32 %v1174, 0.0
    %v1199 = vmul.f32 %v1187, 1.442695
    %v1200 = vpow.pop %v1199
    %v1201 = vmul.f32 %v1188, 1.442695
    %v1202 = vpow.pop %v1201
    %v1203 = vmul.f32 %v1189, 1.442695
    %v1204 = vpow.pop %v1203
    %v1205 = vmul.f32 %v1190, 1.442695
    %v1206 = vpow.pop %v1205
    %v1207 = vmul.f32 %v1191, 1.442695
    %v1208 = vpow.pop %v1207
    %v1209 = vmul.f32 %v1192, 1.442695
    %v1210 = vpow.pop %v1209
    %v1211 = vmul.f32 %v1193, 1.442695
    %v1212 = vpow.pop %v1211
    %v1213 = vmul.f32 %v1194, 1.442695
    %v1214 = vpow.pop %v1213
    %v1215 = vmul.f32 %v1195, 1.442695
    %v1216 = vpow.pop %v1215
    %v1217 = vmul.f32 %v1196, 1.442695
    %v1218 = vpow.pop %v1217
    %v1219 = vmul.f32 %v1197, 1.442695
    %v1220 = vpow.pop %v1219
    %v1221 = vmul.f32 %v1198, 1.442695
    %v1222 = vpow.pop %v1221
    %v1223 = vsub.f32 %v1200, 1.0
    %v1224 = vsub.f32 %v1202, 1.0
    %v1225 = vsub.f32 %v1204, 1.0
    %v1226 = vsub.f32 %v1206, 1.0
    %v1227 = vsub.f32 %v1208, 1.0
    %v1228 = vsub.f32 %v1210, 1.0
    %v1229 = vsub.f32 %v1212, 1.0
    %v1230 = vsub.f32 %v1214, 1.0
    %v1231 = vsub.f32 %v1216, 1.0
    %v1232 = vsub.f32 %v1218, 1.0
    %v1233 = vsub.f32 %v1220, 1.0
    %v1234 = vsub.f32 %v1222, 1.0
    %v1235 = vsel %vm1175, %v1163, %v1223
    %v1236 = vsel %vm1176, %v1164, %v1224
    %v1237 = vsel %vm1177, %v1165, %v1225
    %v1238 = vsel %vm1178, %v1166, %v1226
    %v1239 = vsel %vm1179, %v1167, %v1227
    %v1240 = vsel %vm1180, %v1168, %v1228
    %v1241 = vsel %vm1181, %v1169, %v1229
    %v1242 = vsel %vm1182, %v1170, %v1230
    %v1243 = vsel %vm1183, %v1171, %v1231
    %v1244 = vsel %vm1184, %v1172, %v1232
    %v1245 = vsel %vm1185, %v1173, %v1233
    %v1246 = vsel %vm1186, %v1174, %v1234
    %v1247 = vld [vmem:[%s2 + $0x14] sm:$0xf]
    %v1248 = vpack.c.bf16 %v1236, %v1235
    %v1249 = vpack.c.bf16 %v1238, %v1237
    %v1250 = vpack.c.bf16 %v1240, %v1239
    %v1251 = vpack.c.bf16 %v1242, %v1241
    %v1252 = vpack.c.bf16 %v1244, %v1243
    %v1253 = vpack.c.bf16 %v1246, %v1245
    %vm1254 = vcmask 64512
    %v1256 = vsel %vm1254, %v1248, 0
    %v1259 = vsel %vm1254, %v1249, 0
    %v1262 = vsel %vm1254, %v1250, 0
    %v1265 = vsel %vm1254, %v1251, 0
    %v1268 = vsel %vm1254, %v1252, 0
    %v1271 = vsel %vm1254, %v1253, 0
    %vm1273 = vcmask 1043456
    %v1275 = vsel %vm1273, %v1247, 0
    %1277 = vmatpush.bf16.msra.mxu0 0
    %1278 = vmatpush.bf16.msra.mxu0 0
    %1279 = vmatpush.bf16.msra.mxu0 0
    %1280 = vmatpush.bf16.msra.mxu0 0
    %1281 = vmatpush.bf16.msra.mxu0 0
    %1282 = vmatpush.bf16.msra.mxu0 0
    %1283 = vmatpush.bf16.msra.mxu0 0
    %1284 = vmatpush.bf16.msra.mxu0 %v1275
    %1285 = vmatmul.bf16.gmra.mxu0 %v1256
    %v1286 = vpop.f32.mrf.mxu0
    %v1287 = vadd.f32 0.0, %v1286
    %v1288 = vpop.f32.mrf.mxu0
    %v1289 = vadd.f32 0.0, %v1288
    %1290 = vmatmul.bf16.gmra.mxu0 %v1259
    %v1291 = vpop.f32.mrf.mxu0
    %v1292 = vadd.f32 0.0, %v1291
    %v1293 = vpop.f32.mrf.mxu0
    %v1294 = vadd.f32 0.0, %v1293
    %1295 = vmatmul.bf16.gmra.mxu0 %v1262
    %v1296 = vpop.f32.mrf.mxu0
    %v1297 = vadd.f32 0.0, %v1296
    %v1298 = vpop.f32.mrf.mxu0
    %v1299 = vadd.f32 0.0, %v1298
    %1300 = vmatmul.bf16.gmra.mxu0 %v1265
    %v1301 = vpop.f32.mrf.mxu0
    %v1302 = vadd.f32 0.0, %v1301
    %v1303 = vpop.f32.mrf.mxu0
    %v1304 = vadd.f32 0.0, %v1303
    %1305 = vmatmul.bf16.gmra.mxu0 %v1268
    %v1306 = vpop.f32.mrf.mxu0
    %v1307 = vadd.f32 0.0, %v1306
    %v1308 = vpop.f32.mrf.mxu0
    %v1309 = vadd.f32 0.0, %v1308
    %1310 = vmatmul.bf16.gmra.mxu0 %v1271
    %v1311 = vpop.f32.mrf.mxu0
    %v1312 = vadd.f32 0.0, %v1311
    %v1313 = vpop.f32.mrf.mxu0
    %v1314 = vadd.f32 0.0, %v1313
    %1315 = vdwg.mxu0
    %v1317 = vsel %vm1254, %v751, 0
    %v1320 = vsel %vm1254, %v752, 0
    %v1323 = vsel %vm1254, %v753, 0
    %v1326 = vsel %vm1254, %v754, 0
    %v1329 = vsel %vm1254, %v755, 0
    %v1332 = vsel %vm1254, %v756, 0
    %v1335 = vsel %vm1273, %v750, 0
    %1337 = vmatpush.bf16.msra.mxu0 0
    %1338 = vmatpush.bf16.msra.mxu0 0
    %1339 = vmatpush.bf16.msra.mxu0 0
    %1340 = vmatpush.bf16.msra.mxu0 0
    %1341 = vmatpush.bf16.msra.mxu0 0
    %1342 = vmatpush.bf16.msra.mxu0 0
    %1343 = vmatpush.bf16.msra.mxu0 0
    %1344 = vmatpush.bf16.msra.mxu0 %v1335
    %1345 = vmatmul.bf16.gmra.mxu0 %v1317
    %v1346 = vpop.f32.mrf.mxu0
    %v1347 = vadd.f32 %v1287, %v1346
    %v1348 = vpop.f32.mrf.mxu0
    %v1349 = vadd.f32 %v1289, %v1348
    %1350 = vmatmul.bf16.gmra.mxu0 %v1320
    %v1351 = vpop.f32.mrf.mxu0
    %v1352 = vadd.f32 %v1292, %v1351
    %v1353 = vpop.f32.mrf.mxu0
    %v1354 = vadd.f32 %v1294, %v1353
    %1355 = vmatmul.bf16.gmra.mxu0 %v1323
    %v1356 = vpop.f32.mrf.mxu0
    %v1357 = vadd.f32 %v1297, %v1356
    %v1358 = vpop.f32.mrf.mxu0
    %v1359 = vadd.f32 %v1299, %v1358
    %1360 = vmatmul.bf16.gmra.mxu0 %v1326
    %v1361 = vpop.f32.mrf.mxu0
    %v1362 = vadd.f32 %v1302, %v1361
    %v1363 = vpop.f32.mrf.mxu0
    %v1364 = vadd.f32 %v1304, %v1363
    %1365 = vmatmul.bf16.gmra.mxu0 %v1329
    %v1366 = vpop.f32.mrf.mxu0
    %v1367 = vadd.f32 %v1307, %v1366
    %v1368 = vpop.f32.mrf.mxu0
    %v1369 = vadd.f32 %v1309, %v1368
    %1370 = vmatmul.bf16.gmra.mxu0 %v1332
    %v1371 = vpop.f32.mrf.mxu0
    %v1372 = vadd.f32 %v1312, %v1371
    %v1373 = vpop.f32.mrf.mxu0
    %v1374 = vadd.f32 %v1314, %v1373
    %1375 = vdwg.mxu0
    %v1376 = vpack.c.bf16 %v1349, %v1347
    %v1377 = vpack.c.bf16 %v1354, %v1352
    %v1378 = vpack.c.bf16 %v1359, %v1357
    %v1379 = vpack.c.bf16 %v1364, %v1362
    %v1380 = vpack.c.bf16 %v1369, %v1367
    %v1381 = vpack.c.bf16 %v1374, %v1372
    %v1382 = vld [vmem:[%s2 + $0x18] sm:$0x3]
    %vm1383 = vcmask 31744
    %v1385 = vsel %vm1383, %v1376, 0
    %v1388 = vsel %vm1383, %v1377, 0
    %v1391 = vsel %vm1383, %v1378, 0
    %v1394 = vsel %vm1383, %v1379, 0
    %v1397 = vsel %vm1383, %v1380, 0
    %v1400 = vsel %vm1383, %v1381, 0
    %v1403 = vsel %vm108, %v1382, 0
    %1405 = vmatpush.bf16.msra.mxu0 0
    %1406 = vmatpush.bf16.msra.mxu0 0
    %1407 = vmatpush.bf16.msra.mxu0 0
    %1408 = vmatpush.bf16.msra.mxu0 0
    %1409 = vmatpush.bf16.msra.mxu0 0
    %1410 = vmatpush.bf16.msra.mxu0 0
    %1411 = vmatpush.bf16.msra.mxu0 0
    %1412 = vmatpush.bf16.msra.mxu0 %v1403
    %1413 = vmatmul.bf16.gmra.mxu0 %v1385
    %v1414 = vpop.f32.mrf.mxu0
    %v1415 = vadd.f32 0.0, %v1414
    %v1416 = vpop.f32.mrf.mxu0
    %v1417 = vadd.f32 0.0, %v1416
    %1418 = vmatmul.bf16.gmra.mxu0 %v1388
    %v1419 = vpop.f32.mrf.mxu0
    %v1420 = vadd.f32 0.0, %v1419
    %v1421 = vpop.f32.mrf.mxu0
    %v1422 = vadd.f32 0.0, %v1421
    %1423 = vmatmul.bf16.gmra.mxu0 %v1391
    %v1424 = vpop.f32.mrf.mxu0
    %v1425 = vadd.f32 0.0, %v1424
    %v1426 = vpop.f32.mrf.mxu0
    %v1427 = vadd.f32 0.0, %v1426
    %1428 = vmatmul.bf16.gmra.mxu0 %v1394
    %v1429 = vpop.f32.mrf.mxu0
    %v1430 = vadd.f32 0.0, %v1429
    %v1431 = vpop.f32.mrf.mxu0
    %v1432 = vadd.f32 0.0, %v1431
    %1433 = vmatmul.bf16.gmra.mxu0 %v1397
    %v1434 = vpop.f32.mrf.mxu0
    %v1435 = vadd.f32 0.0, %v1434
    %v1436 = vpop.f32.mrf.mxu0
    %v1437 = vadd.f32 0.0, %v1436
    %1438 = vmatmul.bf16.gmra.mxu0 %v1400
    %v1439 = vpop.f32.mrf.mxu0
    %v1440 = vadd.f32 0.0, %v1439
    %v1441 = vpop.f32.mrf.mxu0
    %v1442 = vadd.f32 0.0, %v1441
    %1443 = vdwg.mxu0
    %1456 = vrot.lane.b32.xlu0 %v1415, 127
    %v1457 = vpop.permute.xlu0 %1456
    %1458 = vrot.lane.b32.xlu0 %v1417, 127
    %v1459 = vpop.permute.xlu0 %1458
    %1460 = vrot.lane.b32.xlu0 %v1420, 127
    %v1461 = vpop.permute.xlu0 %1460
    %1462 = vrot.lane.b32.xlu0 %v1422, 127
    %v1463 = vpop.permute.xlu0 %1462
    %1464 = vrot.lane.b32.xlu0 %v1425, 127
    %v1465 = vpop.permute.xlu0 %1464
    %1466 = vrot.lane.b32.xlu0 %v1427, 127
    %v1467 = vpop.permute.xlu0 %1466
    %1468 = vrot.lane.b32.xlu0 %v1430, 127
    %v1469 = vpop.permute.xlu0 %1468
    %1470 = vrot.lane.b32.xlu0 %v1432, 127
    %v1471 = vpop.permute.xlu0 %1470
    %1472 = vrot.lane.b32.xlu0 %v1435, 127
    %v1473 = vpop.permute.xlu0 %1472
    %1474 = vrot.lane.b32.xlu0 %v1437, 127
    %v1475 = vpop.permute.xlu0 %1474
    %1476 = vrot.lane.b32.xlu0 %v1440, 127
    %v1477 = vpop.permute.xlu0 %1476
    %1478 = vrot.lane.b32.xlu0 %v1442, 127
    %v1479 = vpop.permute.xlu0 %1478
    %1492 = vxpose.xlu0.b32.start [1/16] %v1457, 128
    %1493 = vxpose.xlu0.b32.cont [2/16] %v1459, 128
    %1494 = vxpose.xlu0.b32.cont [3/16] %v1461, 128
    %1495 = vxpose.xlu0.b32.cont [4/16] %v1463, 128
    %1496 = vxpose.xlu0.b32.cont [5/16] %v1465, 128
    %1497 = vxpose.xlu0.b32.cont [6/16] %v1467, 128
    %1498 = vxpose.xlu0.b32.cont [7/16] %v1469, 128
    %1499 = vxpose.xlu0.b32.cont [8/16] %v1471, 128
    %1500 = vxpose.xlu0.b32.cont [9/16] %v1473, 128
    %1501 = vxpose.xlu0.b32.cont [10/16] %v1475, 128
    %1502 = vxpose.xlu0.b32.cont [11/16] %v1477, 128
    %1503 = vxpose.xlu0.b32.cont [12/16] %v1479, 128
    %1504 = vxpose.xlu0.b32.cont [13/16] 0.0, 128
    %1505 = vxpose.xlu0.b32.cont [14/16] 0.0, 128
    %1506 = vxpose.xlu0.b32.cont [15/16] 0.0, 128
    %1507 = vxpose.xlu0.b32.end [16/16] 0.0, 128
    %v1508 = vpop.trf.xlu0
    %v1509 = vpop.trf.xlu0
    %v1510 = vpop.trf.xlu0
    %v1511 = vpop.trf.xlu0
    %v1512 = vpop.trf.xlu0
    %v1513 = vpop.trf.xlu0
    %v1514 = vpop.trf.xlu0
    %v1515 = vpop.trf.xlu0
    %v1516 = vpop.trf.xlu0
    %v1517 = vpop.trf.xlu0
    %v1518 = vpop.trf.xlu0
    %v1519 = vpop.trf.xlu0
    %v1520 = vpop.trf.xlu0
    %v1521 = vpop.trf.xlu0
    %v1522 = vpop.trf.xlu0
    %v1523 = vpop.trf.xlu0
    %1524 = vset.pattern.permute.xlu0 0
    %1525 = vperm.xlu0 %1524, %v1415
    %v1526 = vpop.permute.xlu0 %1525
    %1528 = vset.pattern.permute.xlu0 0
    %1529 = vperm.xlu0 %1528, %v1417
    %v1530 = vpop.permute.xlu0 %1529
    %1532 = vset.pattern.permute.xlu0 0
    %1533 = vperm.xlu0 %1532, %v1420
    %v1534 = vpop.permute.xlu0 %1533
    %1536 = vset.pattern.permute.xlu0 0
    %1537 = vperm.xlu0 %1536, %v1422
    %v1538 = vpop.permute.xlu0 %1537
    %1540 = vset.pattern.permute.xlu0 0
    %1541 = vperm.xlu0 %1540, %v1425
    %v1542 = vpop.permute.xlu0 %1541
    %1544 = vset.pattern.permute.xlu0 0
    %1545 = vperm.xlu0 %1544, %v1427
    %v1546 = vpop.permute.xlu0 %1545
    %1548 = vset.pattern.permute.xlu0 0
    %1549 = vperm.xlu0 %1548, %v1430
    %v1550 = vpop.permute.xlu0 %1549
    %1552 = vset.pattern.permute.xlu0 0
    %1553 = vperm.xlu0 %1552, %v1432
    %v1554 = vpop.permute.xlu0 %1553
    %1556 = vset.pattern.permute.xlu0 0
    %1557 = vperm.xlu0 %1556, %v1435
    %v1558 = vpop.permute.xlu0 %1557
    %1560 = vset.pattern.permute.xlu0 0
    %1561 = vperm.xlu0 %1560, %v1437
    %v1562 = vpop.permute.xlu0 %1561
    %1564 = vset.pattern.permute.xlu0 0
    %1565 = vperm.xlu0 %1564, %v1440
    %v1566 = vpop.permute.xlu0 %1565
    %1568 = vset.pattern.permute.xlu0 0
    %1569 = vperm.xlu0 %1568, %v1442
    %v1570 = vpop.permute.xlu0 %1569
    %v1572 = vperm.slane %v1508, 0
    %v1573 = vadd.f32 %v1526, %v1572
    %v1574 = vadd.f32 %v1530, %v1572
    %v1575 = vadd.f32 %v1534, %v1572
    %v1576 = vadd.f32 %v1538, %v1572
    %v1577 = vadd.f32 %v1542, %v1572
    %v1578 = vadd.f32 %v1546, %v1572
    %v1579 = vadd.f32 %v1550, %v1572
    %v1580 = vadd.f32 %v1554, %v1572
    %v1581 = vadd.f32 %v1558, %v1572
    %v1582 = vadd.f32 %v1562, %v1572
    %v1583 = vadd.f32 %v1566, %v1572
    %v1584 = vadd.f32 %v1570, %v1572
    %v1585 = vld [vmem:[%s2 + $0x1c] sm:$0x1]
    %v1586 = vunpack.c.l.bf16 %v1585
    %vm1587 = vcmp.gt.f32.partialorder %v1573, 0.0
    %vm1588 = vcmp.gt.f32.partialorder %v1574, 0.0
    %vm1589 = vcmp.gt.f32.partialorder %v1575, 0.0
    %vm1590 = vcmp.gt.f32.partialorder %v1576, 0.0
    %vm1591 = vcmp.gt.f32.partialorder %v1577, 0.0
    %vm1592 = vcmp.gt.f32.partialorder %v1578, 0.0
    %vm1593 = vcmp.gt.f32.partialorder %v1579, 0.0
    %vm1594 = vcmp.gt.f32.partialorder %v1580, 0.0
    %vm1595 = vcmp.gt.f32.partialorder %v1581, 0.0
    %vm1596 = vcmp.gt.f32.partialorder %v1582, 0.0
    %vm1597 = vcmp.gt.f32.partialorder %v1583, 0.0
    %vm1598 = vcmp.gt.f32.partialorder %v1584, 0.0
    %v1599 = vmul.f32 %v1573, 0.2
    %v1600 = vmul.f32 %v1574, 0.2
    %v1601 = vmul.f32 %v1575, 0.2
    %v1602 = vmul.f32 %v1576, 0.2
    %v1603 = vmul.f32 %v1577, 0.2
    %v1604 = vmul.f32 %v1578, 0.2
    %v1605 = vmul.f32 %v1579, 0.2
    %v1606 = vmul.f32 %v1580, 0.2
    %v1607 = vmul.f32 %v1581, 0.2
    %v1608 = vmul.f32 %v1582, 0.2
    %v1609 = vmul.f32 %v1583, 0.2
    %v1610 = vmul.f32 %v1584, 0.2
    %v1611 = vsel %vm1587, %v1573, %v1599
    %v1612 = vsel %vm1588, %v1574, %v1600
    %v1613 = vsel %vm1589, %v1575, %v1601
    %v1614 = vsel %vm1590, %v1576, %v1602
    %v1615 = vsel %vm1591, %v1577, %v1603
    %v1616 = vsel %vm1592, %v1578, %v1604
    %v1617 = vsel %vm1593, %v1579, %v1605
    %v1618 = vsel %vm1594, %v1580, %v1606
    %v1619 = vsel %vm1595, %v1581, %v1607
    %v1620 = vsel %vm1596, %v1582, %v1608
    %v1621 = vsel %vm1597, %v1583, %v1609
    %v1622 = vsel %vm1598, %v1584, %v1610
    %v1623 = vadd.f32 %v1611, %v32
    %v1624 = vadd.f32 %v1612, %v33
    %v1625 = vadd.f32 %v1613, %v34
    %v1626 = vadd.f32 %v1614, %v35
    %v1627 = vadd.f32 %v1615, %v36
    %v1628 = vadd.f32 %v1616, %v37
    %v1629 = vadd.f32 %v1617, %v38
    %v1630 = vadd.f32 %v1618, %v39
    %v1631 = vadd.f32 %v1619, %v40
    %v1632 = vadd.f32 %v1620, %v41
    %v1633 = vadd.f32 %v1621, %v42
    %v1634 = vadd.f32 %v1622, %v43
    %v1635 = vsel %vm449, %v1623, -inf
    %1636 = vmax.xlane.f32.xlu0 %v1635
    %v1637 = vpop.xlane.xlu0 %1636
    %v1638 = vsel %vm449, %v1624, -inf
    %1639 = vmax.xlane.f32.xlu0 %v1638
    %v1640 = vpop.xlane.xlu0 %1639
    %v1641 = vsel %vm449, %v1625, -inf
    %1642 = vmax.xlane.f32.xlu0 %v1641
    %v1643 = vpop.xlane.xlu0 %1642
    %v1644 = vsel %vm449, %v1626, -inf
    %1645 = vmax.xlane.f32.xlu0 %v1644
    %v1646 = vpop.xlane.xlu0 %1645
    %v1647 = vsel %vm449, %v1627, -inf
    %1648 = vmax.xlane.f32.xlu0 %v1647
    %v1649 = vpop.xlane.xlu0 %1648
    %v1650 = vsel %vm449, %v1628, -inf
    %1651 = vmax.xlane.f32.xlu0 %v1650
    %v1652 = vpop.xlane.xlu0 %1651
    %v1653 = vsel %vm449, %v1629, -inf
    %1654 = vmax.xlane.f32.xlu0 %v1653
    %v1655 = vpop.xlane.xlu0 %1654
    %v1656 = vsel %vm449, %v1630, -inf
    %1657 = vmax.xlane.f32.xlu0 %v1656
    %v1658 = vpop.xlane.xlu0 %1657
    %v1659 = vsel %vm449, %v1631, -inf
    %1660 = vmax.xlane.f32.xlu0 %v1659
    %v1661 = vpop.xlane.xlu0 %1660
    %v1662 = vsel %vm449, %v1632, -inf
    %1663 = vmax.xlane.f32.xlu0 %v1662
    %v1664 = vpop.xlane.xlu0 %1663
    %v1665 = vsel %vm449, %v1633, -inf
    %1666 = vmax.xlane.f32.xlu0 %v1665
    %v1667 = vpop.xlane.xlu0 %1666
    %v1668 = vsel %vm449, %v1634, -inf
    %1669 = vmax.xlane.f32.xlu0 %v1668
    %v1670 = vpop.xlane.xlu0 %1669
    %v1671 = vsub.f32 %v1623, %v1637
    %v1672 = vsub.f32 %v1624, %v1640
    %v1673 = vsub.f32 %v1625, %v1643
    %v1674 = vsub.f32 %v1626, %v1646
    %v1675 = vsub.f32 %v1627, %v1649
    %v1676 = vsub.f32 %v1628, %v1652
    %v1677 = vsub.f32 %v1629, %v1655
    %v1678 = vsub.f32 %v1630, %v1658
    %v1679 = vsub.f32 %v1631, %v1661
    %v1680 = vsub.f32 %v1632, %v1664
    %v1681 = vsub.f32 %v1633, %v1667
    %v1682 = vsub.f32 %v1634, %v1670
    %v1683 = vmul.f32 %v1671, 1.442695
    %v1684 = vpow.pop %v1683
    %v1685 = vmul.f32 %v1672, 1.442695
    %v1686 = vpow.pop %v1685
    %v1687 = vmul.f32 %v1673, 1.442695
    %v1688 = vpow.pop %v1687
    %v1689 = vmul.f32 %v1674, 1.442695
    %v1690 = vpow.pop %v1689
    %v1691 = vmul.f32 %v1675, 1.442695
    %v1692 = vpow.pop %v1691
    %v1693 = vmul.f32 %v1676, 1.442695
    %v1694 = vpow.pop %v1693
    %v1695 = vmul.f32 %v1677, 1.442695
    %v1696 = vpow.pop %v1695
    %v1697 = vmul.f32 %v1678, 1.442695
    %v1698 = vpow.pop %v1697
    %v1699 = vmul.f32 %v1679, 1.442695
    %v1700 = vpow.pop %v1699
    %v1701 = vmul.f32 %v1680, 1.442695
    %v1702 = vpow.pop %v1701
    %v1703 = vmul.f32 %v1681, 1.442695
    %v1704 = vpow.pop %v1703
    %v1705 = vmul.f32 %v1682, 1.442695
    %v1706 = vpow.pop %v1705
    %v1707 = vsel %vm449, %v1684, 0.0
    %1708 = vadd.xlane.f32.xlu0 %v1707
    %v1709 = vpop.xlane.xlu0 %1708
    %v1710 = vsel %vm449, %v1686, 0.0
    %1711 = vadd.xlane.f32.xlu0 %v1710
    %v1712 = vpop.xlane.xlu0 %1711
    %v1713 = vsel %vm449, %v1688, 0.0
    %1714 = vadd.xlane.f32.xlu0 %v1713
    %v1715 = vpop.xlane.xlu0 %1714
    %v1716 = vsel %vm449, %v1690, 0.0
    %1717 = vadd.xlane.f32.xlu0 %v1716
    %v1718 = vpop.xlane.xlu0 %1717
    %v1719 = vsel %vm449, %v1692, 0.0
    %1720 = vadd.xlane.f32.xlu0 %v1719
    %v1721 = vpop.xlane.xlu0 %1720
    %v1722 = vsel %vm449, %v1694, 0.0
    %1723 = vadd.xlane.f32.xlu0 %v1722
    %v1724 = vpop.xlane.xlu0 %1723
    %v1725 = vsel %vm449, %v1696, 0.0
    %1726 = vadd.xlane.f32.xlu0 %v1725
    %v1727 = vpop.xlane.xlu0 %1726
    %v1728 = vsel %vm449, %v1698, 0.0
    %1729 = vadd.xlane.f32.xlu0 %v1728
    %v1730 = vpop.xlane.xlu0 %1729
    %v1731 = vsel %vm449, %v1700, 0.0
    %1732 = vadd.xlane.f32.xlu0 %v1731
    %v1733 = vpop.xlane.xlu0 %1732
    %v1734 = vsel %vm449, %v1702, 0.0
    %1735 = vadd.xlane.f32.xlu0 %v1734
    %v1736 = vpop.xlane.xlu0 %1735
    %v1737 = vsel %vm449, %v1704, 0.0
    %1738 = vadd.xlane.f32.xlu0 %v1737
    %v1739 = vpop.xlane.xlu0 %1738
    %v1740 = vsel %vm449, %v1706, 0.0
    %1741 = vadd.xlane.f32.xlu0 %v1740
    %v1742 = vpop.xlane.xlu0 %1741
    %v1743 = vmax.f32 %v1709, 1e-20
    %v1744 = vmax.f32 %v1712, 1e-20
    %v1745 = vmax.f32 %v1715, 1e-20
    %v1746 = vmax.f32 %v1718, 1e-20
    %v1747 = vmax.f32 %v1721, 1e-20
    %v1748 = vmax.f32 %v1724, 1e-20
    %v1749 = vmax.f32 %v1727, 1e-20
    %v1750 = vmax.f32 %v1730, 1e-20
    %v1751 = vmax.f32 %v1733, 1e-20
    %v1752 = vmax.f32 %v1736, 1e-20
    %v1753 = vmax.f32 %v1739, 1e-20
    %v1754 = vmax.f32 %v1742, 1e-20
    %v1755 = vrcp.pop %v1743
    %v1756 = vrcp.pop %v1744
    %v1757 = vrcp.pop %v1745
    %v1758 = vrcp.pop %v1746
    %v1759 = vrcp.pop %v1747
    %v1760 = vrcp.pop %v1748
    %v1761 = vrcp.pop %v1749
    %v1762 = vrcp.pop %v1750
    %v1763 = vrcp.pop %v1751
    %v1764 = vrcp.pop %v1752
    %v1765 = vrcp.pop %v1753
    %v1766 = vrcp.pop %v1754
    %v1767 = vpack.c.bf16 %v1686, %v1684
    %v1768 = vpack.c.bf16 %v1690, %v1688
    %v1769 = vpack.c.bf16 %v1694, %v1692
    %v1770 = vpack.c.bf16 %v1698, %v1696
    %v1771 = vpack.c.bf16 %v1702, %v1700
    %v1772 = vpack.c.bf16 %v1706, %v1704
    %v1774 = vsel %vm449, %v1767, 0
    %v1777 = vsel %vm449, %v1768, 0
    %v1780 = vsel %vm449, %v1769, 0
    %v1783 = vsel %vm449, %v1770, 0
    %v1786 = vsel %vm449, %v1771, 0
    %v1789 = vsel %vm449, %v1772, 0
    %1791 = vmatpush.bf16.msra.mxu0 0
    %1792 = vmatpush.bf16.msra.mxu0 0
    %1793 = vmatpush.bf16.msra.mxu0 %v1381
    %1794 = vmatpush.bf16.msra.mxu0 %v1380
    %1795 = vmatpush.bf16.msra.mxu0 %v1379
    %1796 = vmatpush.bf16.msra.mxu0 %v1378
    %1797 = vmatpush.bf16.msra.mxu0 %v1377
    %1798 = vmatpush.bf16.msra.mxu0 %v1376
    %1799 = vmatmul.bf16.gmra.mxu0 %v1774
    %v1800 = vpop.f32.mrf.mxu0
    %v1801 = vadd.f32 0.0, %v1800
    %v1802 = vpop.f32.mrf.mxu0
    %v1803 = vadd.f32 0.0, %v1802
    %1804 = vmatmul.bf16.gmra.mxu0 %v1777
    %v1805 = vpop.f32.mrf.mxu0
    %v1806 = vadd.f32 0.0, %v1805
    %v1807 = vpop.f32.mrf.mxu0
    %v1808 = vadd.f32 0.0, %v1807
    %1809 = vmatmul.bf16.gmra.mxu0 %v1780
    %v1810 = vpop.f32.mrf.mxu0
    %v1811 = vadd.f32 0.0, %v1810
    %v1812 = vpop.f32.mrf.mxu0
    %v1813 = vadd.f32 0.0, %v1812
    %1814 = vmatmul.bf16.gmra.mxu0 %v1783
    %v1815 = vpop.f32.mrf.mxu0
    %v1816 = vadd.f32 0.0, %v1815
    %v1817 = vpop.f32.mrf.mxu0
    %v1818 = vadd.f32 0.0, %v1817
    %1819 = vmatmul.bf16.gmra.mxu0 %v1786
    %v1820 = vpop.f32.mrf.mxu0
    %v1821 = vadd.f32 0.0, %v1820
    %v1822 = vpop.f32.mrf.mxu0
    %v1823 = vadd.f32 0.0, %v1822
    %1824 = vmatmul.bf16.gmra.mxu0 %v1789
    %v1825 = vpop.f32.mrf.mxu0
    %v1826 = vadd.f32 0.0, %v1825
    %v1827 = vpop.f32.mrf.mxu0
    %v1828 = vadd.f32 0.0, %v1827
    %1829 = vdwg.mxu0
    %v1830 = vmul.f32 %v1801, %v1755
    %v1831 = vmul.f32 %v1803, %v1756
    %v1832 = vmul.f32 %v1806, %v1757
    %v1833 = vmul.f32 %v1808, %v1758
    %v1834 = vmul.f32 %v1811, %v1759
    %v1835 = vmul.f32 %v1813, %v1760
    %v1836 = vmul.f32 %v1816, %v1761
    %v1837 = vmul.f32 %v1818, %v1762
    %v1838 = vmul.f32 %v1821, %v1763
    %v1839 = vmul.f32 %v1823, %v1764
    %v1840 = vmul.f32 %v1826, %v1765
    %v1841 = vmul.f32 %v1828, %v1766
    %v1842 = vperm.slane %v1586, 0
    %v1843 = vadd.f32 %v1830, %v1842
    %v1844 = vadd.f32 %v1831, %v1842
    %v1845 = vadd.f32 %v1832, %v1842
    %v1846 = vadd.f32 %v1833, %v1842
    %v1847 = vadd.f32 %v1834, %v1842
    %v1848 = vadd.f32 %v1835, %v1842
    %v1849 = vadd.f32 %v1836, %v1842
    %v1850 = vadd.f32 %v1837, %v1842
    %v1851 = vadd.f32 %v1838, %v1842
    %v1852 = vadd.f32 %v1839, %v1842
    %v1853 = vadd.f32 %v1840, %v1842
    %v1854 = vadd.f32 %v1841, %v1842
    %v1855 = vld [vmem:[%s2 + $0x20] sm:$0x3]
    %v1856 = vunpack.c.l.bf16 %v1855
    %v1857 = vld [vmem:[%s2 + $0x24] sm:$0x1]
    %v1858 = vunpack.c.l.bf16 %v1857
    %v1859 = vperm.slane %v1858, 0
    %v1861 = vsel %vm1383, %v1843, 0
    %v1864 = vsel %vm1383, %v1844, 0
    %v1867 = vsel %vm1383, %v1845, 0
    %v1870 = vsel %vm1383, %v1846, 0
    %v1873 = vsel %vm1383, %v1847, 0
    %v1876 = vsel %vm1383, %v1848, 0
    %v1879 = vsel %vm1383, %v1849, 0
    %v1882 = vsel %vm1383, %v1850, 0
    %v1885 = vsel %vm1383, %v1851, 0
    %v1888 = vsel %vm1383, %v1852, 0
    %v1891 = vsel %vm1383, %v1853, 0
    %v1894 = vsel %vm1383, %v1854, 0
    %v1897 = vsel %vm1273, %v1856, 0
    %1899 = vmatpush.msra.mxu0 0.0
    %1900 = vmatpush.msra.mxu0 0.0
    %1901 = vmatpush.msra.mxu0 0.0
    %1902 = vmatpush.msra.mxu0 0.0
    %1903 = vmatpush.msra.mxu0 0.0
    %1904 = vmatpush.msra.mxu0 0.0
    %1905 = vmatpush.msra.mxu0 0.0
    %1906 = vmatpush.msra.mxu0 0.0
    %1907 = vmatpush.msra.mxu0 0.0
    %1908 = vmatpush.msra.mxu0 0.0
    %1909 = vmatpush.msra.mxu0 0.0
    %1910 = vmatpush.msra.mxu0 0.0
    %1911 = vmatpush.msra.mxu0 0.0
    %1912 = vmatpush.msra.mxu0 0.0
    %1913 = vmatpush.msra.mxu0 0.0
    %1914 = vmatpush.msra.mxu0 %v1897
    %1915 = vmatmul.f32.gmra.mxu0 %v1861
    %v1916 = vpop.f32.mrf.mxu0
    %v1917 = vadd.f32 %v1859, %v1916
    %1918 = vmatmul.f32.gmra.mxu0 %v1864
    %v1919 = vpop.f32.mrf.mxu0
    %v1920 = vadd.f32 %v1859, %v1919
    %1921 = vmatmul.f32.gmra.mxu0 %v1867
    %v1922 = vpop.f32.mrf.mxu0
    %v1923 = vadd.f32 %v1859, %v1922
    %1924 = vmatmul.f32.gmra.mxu0 %v1870
    %v1925 = vpop.f32.mrf.mxu0
    %v1926 = vadd.f32 %v1859, %v1925
    %1927 = vmatmul.f32.gmra.mxu0 %v1873
    %v1928 = vpop.f32.mrf.mxu0
    %v1929 = vadd.f32 %v1859, %v1928
    %1930 = vmatmul.f32.gmra.mxu0 %v1876
    %v1931 = vpop.f32.mrf.mxu0
    %v1932 = vadd.f32 %v1859, %v1931
    %1933 = vmatmul.f32.gmra.mxu0 %v1879
    %v1934 = vpop.f32.mrf.mxu0
    %v1935 = vadd.f32 %v1859, %v1934
    %1936 = vmatmul.f32.gmra.mxu0 %v1882
    %v1937 = vpop.f32.mrf.mxu0
    %v1938 = vadd.f32 %v1859, %v1937
    %1939 = vmatmul.f32.gmra.mxu0 %v1885
    %v1940 = vpop.f32.mrf.mxu0
    %v1941 = vadd.f32 %v1859, %v1940
    %1942 = vmatmul.f32.gmra.mxu0 %v1888
    %v1943 = vpop.f32.mrf.mxu0
    %v1944 = vadd.f32 %v1859, %v1943
    %1945 = vmatmul.f32.gmra.mxu0 %v1891
    %v1946 = vpop.f32.mrf.mxu0
    %v1947 = vadd.f32 %v1859, %v1946
    %1948 = vmatmul.f32.gmra.mxu0 %v1894
    %v1949 = vpop.f32.mrf.mxu0
    %v1950 = vadd.f32 %v1859, %v1949
    %1951 = vdwg.mxu0
    %1952 = vst [vmem:[#allocation5] sm:$0xff] %v1917
    %1953 = vst [vmem:[#allocation5 + $0x8] sm:$0xff] %v1920
    %1954 = vst [vmem:[#allocation5 + $0x10] sm:$0xff] %v1923
    %1955 = vst [vmem:[#allocation5 + $0x18] sm:$0xff] %v1926
    %1956 = vst [vmem:[#allocation5 + $0x20] sm:$0xff] %v1929
    %1957 = vst [vmem:[#allocation5 + $0x28] sm:$0xff] %v1932
    %1958 = vst [vmem:[#allocation5 + $0x30] sm:$0xff] %v1935
    %1959 = vst [vmem:[#allocation5 + $0x38] sm:$0xff] %v1938
    %1960 = vst [vmem:[#allocation5 + $0x40] sm:$0xff] %v1941
    %1961 = vst [vmem:[#allocation5 + $0x48] sm:$0xff] %v1944
    %1962 = vst [vmem:[#allocation5 + $0x50] sm:$0xff] %v1947
    %1963 = vst [vmem:[#allocation5 + $0x58] sm:$0xff] %v1950
    // Predicated region
    $region18: #{tpu_custom_call.1} parent=1 // pred_check
      _
    $region19: #{tpu_custom_call.1} parent=1 // pred_check_branch
      %1965 = sbr.rel (0) target = $region21
    $region20: #{tpu_custom_call.1} parent=1 // pred_region
      %1967 = vsyncadd [#allocation4], 0
      %s1968 = sshll.u32 [#allocation5], 4
      %s1969 = int_to_ptr.vmem [resolvable:$true] %s1968
      %s1970 = sshll.u32 %s3, 4
      %s1971 = int_to_ptr.hbm [resolvable:$true] %s1970
      %1976 = dma.vmem_to_hbm [thread:$0]  %s1969, 1536, %s1971, [#allocation4], 128, 128, 8
    $region21: #{tpu_custom_call.1} parent=1 // pred_fallthru
      _
    // Predicated region
    $region22: #{tpu_custom_call.1} parent=1 // pred_check
      _
    $region23: #{tpu_custom_call.1} parent=1 // pred_check_branch
      %1978 = sbr.rel (0) target = $region25
    $region24: #{tpu_custom_call.1} parent=1 // pred_region
      %1980 = dma.done [#allocation4], 1536
    $region25: #{tpu_custom_call.1} parent=1 // pred_fallthru
      _
    %1981 = vsyncpa [#allocation3], 1
    %1982 = vsyncpa [#allocation4], 1

</llo_original>
